<compile_context>
chip_gen: v6e
topology: v6e:2x2x1
jax: 0.10.0
libtpu: 0.0.40
codegen_flags: <defaults>
</compile_context>

<pallas_src>
import math
from functools import partial

import jax
import jax.numpy as jnp
from jax.experimental import pallas as pl
from jax.experimental.pallas import tpu as pltpu


# --------------------------------------------------------------------------------------
# Attention kernel: grid (B, H), per-head bias tile, vec accumulated in-kernel.
# --------------------------------------------------------------------------------------
def _equiv_attn_kernel(h_ref, pos_ref, post_ref, bias_ref, mask_ref, vec_in_ref,
                       wq_ref, wk_ref, wv_ref, wo_ref, wvec_ref,
                       o_ref, vec_out_ref, a_sum_ref, *, num_heads):
    """One (batch, head) grid step.

    h_ref     : (1, L, D)    layer-normed scalar features (bf16)
    pos_ref   : (1, L, 3)    positions (f32)
    post_ref  : (1, 3, L)    positions, lane-dense per coordinate (f32)
    bias_ref  : (1, 1, L, L) this head's additive attention bias (bf16)
    mask_ref  : (1, 1, L)    additive key padding mask (f32, 0 / -1e9)
    vec_in_ref: (1, 3, L, D) running equivariant vector state (f32, aliased to vec_out)
    wq/wk/wv  : (1, D, dh)   per-head projection weights (bf16)
    wo_ref    : (1, dh, D)   per-head rows of the output projection (bf16)
    wvec_ref  : (D, D)       gate projection for the vector update (bf16)
    o_ref     : (1, L, D)    scalar attention output, accumulated over heads (f32)
    vec_out_ref:(1, 3, L, D) updated vector state (f32)
    a_sum_ref : (L, L)       VMEM scratch, sum of attention probs over heads (f32)
    """
    hd = pl.program_id(1)
    d_head = wq_ref.shape[2]
    scale = 1.0 / math.sqrt(d_head)

    h_bf = h_ref[0]                                                       # (L, D) bf16

    # Per-head projections (bf16 MXU operands, f32 accumulation). The per-head weight
    # slices are delivered by the BlockSpec, so total projection FLOPs over the head
    # axis equal a single fused [L,D]@[D,D] projection with no in-kernel lane slicing.
    q = jnp.dot(h_bf, wq_ref[0], preferred_element_type=jnp.float32)      # (L, dh)
    k = jnp.dot(h_bf, wk_ref[0], preferred_element_type=jnp.float32)      # (L, dh)
    v = jnp.dot(h_bf, wv_ref[0], preferred_element_type=jnp.float32)      # (L, dh)

    # scores: q @ k^T (NT matmul) with bf16 operands, f32 accumulation.
    s = jax.lax.dot_general(q.astype(jnp.bfloat16), k.astype(jnp.bfloat16),
                            (((1,), (1,)), ((), ())),
                            preferred_element_type=jnp.float32)            # (L, L)
    s = s * scale + bias_ref[0, 0].astype(jnp.float32) + mask_ref[0].astype(jnp.float32)

    # softmax in f32; reciprocal on the EUP slot instead of VALU division.
    s = s - jnp.max(s, axis=-1, keepdims=True)
    e = jnp.exp(s)
    p = e * pl.reciprocal(jnp.sum(e, axis=-1, keepdims=True), approx=True)  # (L, L) f32

    @pl.when(hd == 0)
    def _init():
        o_ref[...] = jnp.zeros_like(o_ref)
        a_sum_ref[...] = jnp.zeros_like(a_sum_ref)

    a_sum_ref[...] += p

    ctx = jnp.dot(p.astype(jnp.bfloat16), v.astype(jnp.bfloat16),
                  preferred_element_type=jnp.float32)                      # (L, dh)
    # fold this head's rows of Wo: sum_h ctx_h @ Wo[h*dh:(h+1)*dh, :]
    o_ref[0] = o_ref[0] + jnp.dot(ctx.astype(jnp.bfloat16), wo_ref[0],
                                  preferred_element_type=jnp.float32)      # (L, D)

    @pl.when(hd == num_heads - 1)
    def _finalize():
        a_mean = a_sum_ref[...] * (1.0 / num_heads)                        # (L, L) f32
        gate = jnp.dot(h_bf, wvec_ref[...], preferred_element_type=jnp.float32)  # (L, D)
        gate_bf = gate.astype(jnp.bfloat16)

        pos = pos_ref[0].astype(jnp.float32)        # (L, 3)  -> per-coordinate column
        rows = post_ref[0].astype(jnp.float32)      # (3, L)  -> per-coordinate dense row
        rel = [pos[:, c:c + 1] - rows[c:c + 1, :] for c in range(3)]       # (L, L) each
        d2 = rel[0] * rel[0] + rel[1] * rel[1] + rel[2] * rel[2]
        base = a_mean * jax.lax.rsqrt(d2 + 1e-6)                           # f32

        # vec_i[c] += sum_j A[i,j] * rhat_ij[c] * gate_j   (lane-dense (3, L, D) writes)
        for c in range(3):
            w_c = base * rel[c]                      # exact 0 on the diagonal, f32
            upd = jnp.dot(w_c.astype(jnp.bfloat16), gate_bf,
                          preferred_element_type=jnp.float32)              # (L, D)
            vec_out_ref[0, c] = (vec_in_ref[0, c] + upd).astype(vec_out_ref.dtype)


def equivariant_attention(h_bf, pos, pos_t, bias_bf, mask_add, vec,
                          wq3, wk3, wv3, wo3, wvec_bf):
    B, L, D = h_bf.shape
    H = bias_bf.shape[1]
    dh = D // H
    kernel = partial(_equiv_attn_kernel, num_heads=H)
    out_shapes = (jax.ShapeDtypeStruct((B, L, D), jnp.float32),
                  jax.ShapeDtypeStruct((B, 3, L, D), jnp.float32))
    in_specs = [
        pl.BlockSpec((1, L, D), lambda b, h: (b, 0, 0)),          # h (bf16)
        pl.BlockSpec((1, L, 3), lambda b, h: (b, 0, 0)),          # pos
        pl.BlockSpec((1, 3, L), lambda b, h: (b, 0, 0)),          # pos^T (lane-dense rows)
        pl.BlockSpec((1, 1, L, L), lambda b, h: (b, h, 0, 0)),    # one head's bias tile
        pl.BlockSpec((1, 1, L), lambda b, h: (b, 0, 0)),          # additive key mask
        pl.BlockSpec((1, 3, L, D), lambda b, h: (b, 0, 0, 0)),    # running vec (aliased)
        pl.BlockSpec((1, D, dh), lambda b, h: (h, 0, 0)),         # Wq per head
        pl.BlockSpec((1, D, dh), lambda b, h: (h, 0, 0)),         # Wk per head
        pl.BlockSpec((1, D, dh), lambda b, h: (h, 0, 0)),         # Wv per head
        pl.BlockSpec((1, dh, D), lambda b, h: (h, 0, 0)),         # Wo rows per head
        pl.BlockSpec((D, D), lambda b, h: (0, 0)),                # Wvec
    ]
    out_specs = (pl.BlockSpec((1, L, D), lambda b, h: (b, 0, 0)),
                 pl.BlockSpec((1, 3, L, D), lambda b, h: (b, 0, 0, 0)))
    return pl.pallas_call(
        kernel,
        out_shape=out_shapes,
        grid=(B, H),
        in_specs=in_specs,
        out_specs=out_specs,
        scratch_shapes=[pltpu.VMEM((L, L), jnp.float32)],
        input_output_aliases={5: 1},   # vec_in  ->  vec_out (in-place accumulate)
        compiler_params=pltpu.CompilerParams(
            dimension_semantics=("parallel", "arbitrary"),
            vmem_limit_bytes=64 * 1024 * 1024),
    )(h_bf, pos, pos_t, bias_bf, mask_add, vec, wq3, wk3, wv3, wo3, wvec_bf)


# --------------------------------------------------------------------------------------
# Tiled matmul kernel with f32 accumulator and fused bias / gelu epilogue (FFN).
# --------------------------------------------------------------------------------------
def _matmul_bias_act_kernel(x_ref, w_ref, b_ref, o_ref, acc_ref, *, activation):
    @pl.when(pl.program_id(2) == 0)
    def _zero():
        acc_ref[...] = jnp.zeros_like(acc_ref)

    acc_ref[...] += jnp.dot(x_ref[...], w_ref[...], preferred_element_type=jnp.float32)

    @pl.when(pl.program_id(2) == pl.num_programs(2) - 1)
    def _store():
        y = acc_ref[...] + b_ref[...].astype(jnp.float32)
        if activation == "gelu":
            y = jax.nn.gelu(y)
        o_ref[...] = y.astype(o_ref.dtype)


def _fit_tile(n, cap, mult):
    """Largest tile <= cap that is a multiple of `mult` and divides n; else n (full dim)."""
    if n <= cap:
        return n
    t = (cap // mult) * mult
    while t >= mult:
        if n % t == 0:
            return t
        t -= mult
    return n


def pallas_matmul_bias_act(x, w, b, activation=None, tm=256, tn=256, tk=512):
    M, K = x.shape
    _, N = w.shape
    tm = _fit_tile(M, tm, 8)
    tk = _fit_tile(K, tk, 128)
    tn = _fit_tile(N, tn, 128)
    kernel = partial(_matmul_bias_act_kernel, activation=activation)
    return pl.pallas_call(
        kernel,
        out_shape=jax.ShapeDtypeStruct((M, N), jnp.float32),
        grid=(M // tm, N // tn, K // tk),
        in_specs=[pl.BlockSpec((tm, tk), lambda i, j, k: (i, k)),
                  pl.BlockSpec((tk, tn), lambda i, j, k: (k, j)),
                  pl.BlockSpec((1, tn), lambda i, j, k: (0, j))],
        out_specs=pl.BlockSpec((tm, tn), lambda i, j, k: (i, j)),
        scratch_shapes=[pltpu.VMEM((tm, tn), jnp.float32)],
        compiler_params=pltpu.CompilerParams(
            dimension_semantics=("parallel", "parallel", "arbitrary"),
            vmem_limit_bytes=64 * 1024 * 1024),
    )(x, w, b)


# --------------------------------------------------------------------------------------
# Plain-JAX glue
# --------------------------------------------------------------------------------------
def layer_norm(x, gamma, beta, eps=1e-5):
    mu = jnp.mean(x, axis=-1, keepdims=True)
    var = jnp.mean((x - mu) ** 2, axis=-1, keepdims=True)
    return (x - mu) * jax.lax.rsqrt(var + eps) * gamma + beta


def init_params(key, num_layers, embed_dim, ffn_dim, num_heads):
    def w(k, shape, scale=0.1):
        return jax.random.normal(k, shape, jnp.float32) * scale

    layers = []
    for layer in range(num_layers):
        ks = jax.random.split(jax.random.fold_in(key, layer), 7)
        layers.append({
            "ln1_g": jnp.ones((embed_dim,), jnp.float32),
            "ln1_b": jnp.zeros((embed_dim,), jnp.float32),
            "ln2_g": jnp.ones((embed_dim,), jnp.float32),
            "ln2_b": jnp.zeros((embed_dim,), jnp.float32),
            "wq": w(ks[0], (embed_dim, embed_dim)),
            "wk": w(ks[1], (embed_dim, embed_dim)),
            "wv": w(ks[2], (embed_dim, embed_dim)),
            "wo": w(ks[3], (embed_dim, embed_dim)),
            "wvec": w(ks[4], (embed_dim, embed_dim)),
            "w1": w(ks[5], (embed_dim, ffn_dim)),
            "b1": jnp.zeros((ffn_dim,), jnp.float32),
            "w2": w(ks[6], (ffn_dim, embed_dim)),
            "b2": jnp.zeros((embed_dim,), jnp.float32),
        })
    kh = jax.random.fold_in(key, 10_000)
    return {
        "num_heads": num_heads,
        "layers": layers,
        "ln_f_g": jnp.ones((embed_dim,), jnp.float32),
        "ln_f_b": jnp.zeros((embed_dim,), jnp.float32),
        "w_head": jax.random.normal(kh, (embed_dim, 1), jnp.float32) * 0.1,
    }


def equivariant_decoder_forward(params, batched_data, x, mixed_attn_bias, padding_mask,
                                pbc_expand_batched=None, time_embed=None):
    """Mirrors EquivariantDecoder.forward: pos = batched_data['pos']; GeomFormer(x, pos, ...).

    Returns (node scalar output [B, L, D], node equivariant/vector output [B, L, 3]).
    Dropout layers are identity (inference).
    """
    # TODO(synk): pbc_expand_batched / CellExpander periodic-cell expansion is a
    # data-dependent graph-construction op with no clean Pallas equivalent; not implemented.
    del pbc_expand_batched
    pos = batched_data["pos"].astype(jnp.float32)
    B, L, D = x.shape
    H = params["num_heads"]
    dh = D // H

    if time_embed is not None:
        x = x + time_embed

    pos_t = jnp.transpose(pos, (0, 2, 1))                       # (B, 3, L)
    bias_bf = mixed_attn_bias.astype(jnp.bfloat16)              # halve bias HBM/VMEM traffic
    mask_add = jnp.where(padding_mask, -1e9, 0.0).astype(jnp.float32)[:, None, :]
    vec = jnp.zeros((B, 3, L, D), jnp.float32)                  # lane-dense layout

    for lp in params["layers"]:
        # Pre-split per-head bf16 weights so the kernel never slices lanes (tiny XLA glue,
        # constant-folded under jit).
        wq3 = lp["wq"].reshape(D, H, dh).transpose(1, 0, 2).astype(jnp.bfloat16)  # (H, D, dh)
        wk3 = lp["wk"].reshape(D, H, dh).transpose(1, 0, 2).astype(jnp.bfloat16)
        wv3 = lp["wv"].reshape(D, H, dh).transpose(1, 0, 2).astype(jnp.bfloat16)
        wo3 = lp["wo"].reshape(H, dh, D).astype(jnp.bfloat16)                     # (H, dh, D)
        wvec_bf = lp["wvec"].astype(jnp.bfloat16)

        h_bf = layer_norm(x, lp["ln1_g"], lp["ln1_b"]).astype(jnp.bfloat16)
        o, vec = equivariant_attention(h_bf, pos, pos_t, bias_bf, mask_add, vec,
                                       wq3, wk3, wv3, wo3, wvec_bf)
        x = x + o

        h2 = layer_norm(x, lp["ln2_g"], lp["ln2_b"])
        f = pallas_matmul_bias_act(h2.reshape(B * L, D).astype(jnp.bfloat16),
                                   lp["w1"].astype(jnp.bfloat16),
                                   lp["b1"].reshape(1, -1), activation="gelu")
        f = pallas_matmul_bias_act(f.astype(jnp.bfloat16),
                                   lp["w2"].astype(jnp.bfloat16),
                                   lp["b2"].reshape(1, -1), activation=None)
        x = x + f.reshape(B, L, D)

    x = layer_norm(x, params["ln_f_g"], params["ln_f_b"])

    # Equivariant vector head: N=1 matmul replaced by a cheap VPU reduction over D.
    w_head = params["w_head"][:, 0]                                          # (D,)
    forces = jnp.transpose(jnp.sum(vec * w_head[None, None, None, :], axis=-1),
                           (0, 2, 1))                                        # (B, L, 3)

    node_keep = (~padding_mask)[..., None].astype(jnp.float32)
    return x * node_keep, forces * node_keep


# --------------------------------------------------------------------------------------
# Demo
# --------------------------------------------------------------------------------------
if __name__ == "__main__":
    key = jax.random.PRNGKey(0)
    B, L = 2, 8                       # batch, sequence (atoms)
    D, H, F = 32, 4, 64               # embedding_dim, num_attention_heads, decoder_ffn_dim
    num_pred_attn_layer = 2

    params = init_params(key, num_pred_attn_layer, D, F, H)

    k1, k2, k3, k4 = jax.random.split(jax.random.fold_in(key, 123), 4)
    x = jax.random.normal(k1, (B, L, D), jnp.float32)
    pos = jax.random.normal(k2, (B, L, 3), jnp.float32) * 3.0
    mixed_attn_bias = jax.random.normal(k3, (B, H, L, L), jnp.float32) * 0.1
    padding_mask = jnp.zeros((B, L), jnp.bool_).at[:, L - 2:].set(True)  # last 2 tokens padded
    time_embed = jax.random.normal(k4, (B, L, D), jnp.float32) * 0.05
    batched_data = {"pos": pos}

    x_out, forces = equivariant_decoder_forward(
        params, batched_data, x, mixed_attn_bias, padding_mask, time_embed=time_embed)
    jax.block_until_ready((x_out, forces))

    assert x_out.shape == (B, L, D) and forces.shape == (B, L, 3)
    assert bool(jnp.all(jnp.isfinite(x_out))) and bool(jnp.all(jnp.isfinite(forces)))
    print("KERNEL_OK")
</pallas_src>

<mosaic_0001>
module attributes {stable_mosaic.version = 11 : i64} {
  func.func @_equiv_attn_kernel(%arg0: i32, %arg1: i32, %arg2: memref<1x8x32xbf16, #tpu.memory_space<vmem>>, %arg3: memref<1x8x3xf32, #tpu.memory_space<vmem>>, %arg4: memref<1x3x8xf32, #tpu.memory_space<vmem>>, %arg5: memref<1x1x8x8xbf16, #tpu.memory_space<vmem>>, %arg6: memref<1x1x8xf32, #tpu.memory_space<vmem>>, %arg7: memref<1x3x8x32xf32, #tpu.memory_space<vmem>>, %arg8: memref<1x32x8xbf16, #tpu.memory_space<vmem>>, %arg9: memref<1x32x8xbf16, #tpu.memory_space<vmem>>, %arg10: memref<1x32x8xbf16, #tpu.memory_space<vmem>>, %arg11: memref<1x8x32xbf16, #tpu.memory_space<vmem>>, %arg12: memref<32x32xbf16, #tpu.memory_space<vmem>>, %arg13: memref<1x8x32xf32, #tpu.memory_space<vmem>>, %arg14: memref<1x3x8x32xf32, #tpu.memory_space<vmem>>, %arg15: memref<8x8xf32, #tpu.memory_space<vmem>>) attributes {dimension_semantics = [#tpu.dimension_semantics<parallel>, #tpu.dimension_semantics<arbitrary>], iteration_bounds = array<i64: 2, 4>, scalar_prefetch = 0 : i64, scratch_operands = 1 : i64, tpu.core_type = #tpu.core_type<tc>, window_params = [{transform_indices = @transform_0, window_bounds = array<i64: 1, 8, 32>}, {transform_indices = @transform_1, window_bounds = array<i64: 1, 8, 3>}, {transform_indices = @transform_2, window_bounds = array<i64: 1, 3, 8>}, {transform_indices = @transform_3, window_bounds = array<i64: 1, 1, 8, 8>}, {transform_indices = @transform_4, window_bounds = array<i64: 1, 1, 8>}, {transform_indices = @transform_5, window_bounds = array<i64: 1, 3, 8, 32>}, {transform_indices = @transform_6, window_bounds = array<i64: 1, 32, 8>}, {transform_indices = @transform_7, window_bounds = array<i64: 1, 32, 8>}, {transform_indices = @transform_8, window_bounds = array<i64: 1, 32, 8>}, {transform_indices = @transform_9, window_bounds = array<i64: 1, 8, 32>}, {pipeline_mode = #tpu.pipeline_mode<synchronous>, transform_indices = @transform_10, window_bounds = array<i64: 32, 32>}, {transform_indices = @transform_11, window_bounds = array<i64: 1, 8, 32>}, {transform_indices = @transform_12, window_bounds = array<i64: 1, 3, 8, 32>}]} {
    %c0 = arith.constant 0 : index
    %c0_0 = arith.constant 0 : index
    %c0_1 = arith.constant 0 : index
    %0 = vector.load %arg2[%c0, %c0_0, %c0_1] : memref<1x8x32xbf16, #tpu.memory_space<vmem>>, vector<1x8x32xbf16>
    %1 = vector.shape_cast %0 : vector<1x8x32xbf16> to vector<8x32xbf16>
    %c0_2 = arith.constant 0 : index
    %c0_3 = arith.constant 0 : index
    %c0_4 = arith.constant 0 : index
    %2 = vector.load %arg8[%c0_2, %c0_3, %c0_4] : memref<1x32x8xbf16, #tpu.memory_space<vmem>>, vector<1x32x8xbf16>
    %3 = vector.shape_cast %2 : vector<1x32x8xbf16> to vector<32x8xbf16>
    %cst = arith.constant dense<0.000000e+00> : vector<8x8xf32>
    %4 = tpu.matmul %1, %3, %cst {dimension_numbers = #tpu.dot_dimension_numbers<[1], [0], [0], [1], [0, 0, 1, 1], [], []>} : vector<8x32xbf16>, vector<32x8xbf16>, vector<8x8xf32> -> vector<8x8xf32>
    %c0_5 = arith.constant 0 : index
    %c0_6 = arith.constant 0 : index
    %c0_7 = arith.constant 0 : index
    %5 = vector.load %arg9[%c0_5, %c0_6, %c0_7] : memref<1x32x8xbf16, #tpu.memory_space<vmem>>, vector<1x32x8xbf16>
    %6 = vector.shape_cast %5 : vector<1x32x8xbf16> to vector<32x8xbf16>
    %cst_8 = arith.constant dense<0.000000e+00> : vector<8x8xf32>
    %7 = tpu.matmul %1, %6, %cst_8 {dimension_numbers = #tpu.dot_dimension_numbers<[1], [0], [0], [1], [0, 0, 1, 1], [], []>} : vector<8x32xbf16>, vector<32x8xbf16>, vector<8x8xf32> -> vector<8x8xf32>
    %c0_9 = arith.constant 0 : index
    %c0_10 = arith.constant 0 : index
    %c0_11 = arith.constant 0 : index
    %8 = vector.load %arg10[%c0_9, %c0_10, %c0_11] : memref<1x32x8xbf16, #tpu.memory_space<vmem>>, vector<1x32x8xbf16>
    %9 = vector.shape_cast %8 : vector<1x32x8xbf16> to vector<32x8xbf16>
    %cst_12 = arith.constant dense<0.000000e+00> : vector<8x8xf32>
    %10 = tpu.matmul %1, %9, %cst_12 {dimension_numbers = #tpu.dot_dimension_numbers<[1], [0], [0], [1], [0, 0, 1, 1], [], []>} : vector<8x32xbf16>, vector<32x8xbf16>, vector<8x8xf32> -> vector<8x8xf32>
    %11 = arith.truncf %4 : vector<8x8xf32> to vector<8x8xbf16>
    %12 = arith.truncf %7 : vector<8x8xf32> to vector<8x8xbf16>
    %cst_13 = arith.constant dense<0.000000e+00> : vector<8x8xf32>
    %13 = tpu.matmul %11, %12, %cst_13 {dimension_numbers = #tpu.dot_dimension_numbers<[1], [1], [0], [0], [0, 0, 1, 0], [], []>} : vector<8x8xbf16>, vector<8x8xbf16>, vector<8x8xf32> -> vector<8x8xf32>
    %cst_14 = arith.constant 0.353553385 : f32
    %14 = vector.broadcast %cst_14 : f32 to vector<8x8xf32>
    %15 = arith.mulf %13, %14 : vector<8x8xf32>
    %c0_15 = arith.constant 0 : index
    %c0_16 = arith.constant 0 : index
    %c0_17 = arith.constant 0 : index
    %c0_18 = arith.constant 0 : index
    %16 = vector.load %arg5[%c0_15, %c0_16, %c0_17, %c0_18] : memref<1x1x8x8xbf16, #tpu.memory_space<vmem>>, vector<1x1x8x8xbf16>
    %17 = vector.shape_cast %16 : vector<1x1x8x8xbf16> to vector<8x8xbf16>
    %18 = arith.extf %17 : vector<8x8xbf16> to vector<8x8xf32>
    %19 = arith.addf %15, %18 : vector<8x8xf32>
    %c0_19 = arith.constant 0 : index
    %c0_20 = arith.constant 0 : index
    %c0_21 = arith.constant 0 : index
    %20 = vector.load %arg6[%c0_19, %c0_20, %c0_21] : memref<1x1x8xf32, #tpu.memory_space<vmem>>, vector<1x1x8xf32>
    %21 = vector.shape_cast %20 : vector<1x1x8xf32> to vector<1x8xf32>
    %22 = vector.broadcast %21 : vector<1x8xf32> to vector<8x8xf32>
    %23 = arith.addf %19, %22 : vector<8x8xf32>
    %cst_22 = arith.constant dense<0xFF800000> : vector<8xf32>
    %24 = vector.multi_reduction <maximumf>, %23, %cst_22 [1] : vector<8x8xf32> to vector<8xf32>
    %25 = vector.shape_cast %24 : vector<8xf32> to vector<8x1xf32>
    %26 = vector.broadcast %25 : vector<8x1xf32> to vector<8x8xf32>
    %27 = arith.subf %23, %26 : vector<8x8xf32>
    %28 = math.exp %27 : vector<8x8xf32>
    %cst_23 = arith.constant dense<0.000000e+00> : vector<8xf32>
    %29 = vector.multi_reduction <add>, %28, %cst_23 [1] : vector<8x8xf32> to vector<8xf32>
    %30 = vector.shape_cast %29 : vector<8xf32> to vector<8x1xf32>
    %31 = tpu.reciprocal %30 {approx = true} : vector<8x1xf32> -> vector<8x1xf32>
    %32 = vector.broadcast %31 : vector<8x1xf32> to vector<8x8xf32>
    %33 = arith.mulf %28, %32 : vector<8x8xf32>
    %c0_i32 = arith.constant 0 : i32
    %34 = arith.cmpi eq, %arg1, %c0_i32 : i32
    %35 = arith.extui %34 : i1 to i32
    %c0_i32_24 = arith.constant 0 : i32
    %36 = arith.cmpi ne, %35, %c0_i32_24 : i32
    scf.if %36 {
      %cst_41 = arith.constant 0.000000e+00 : f32
      %56 = vector.broadcast %cst_41 : f32 to vector<1x8x32xf32>
      %c0_42 = arith.constant 0 : index
      %c0_43 = arith.constant 0 : index
      %c0_44 = arith.constant 0 : index
      %57 = vector.load %arg13[%c0_42, %c0_43, %c0_44] : memref<1x8x32xf32, #tpu.memory_space<vmem>>, vector<1x8x32xf32>
      tpu.vector_store %arg13[%c0_42, %c0_43, %c0_44], %56 {strides = array<i32>} : memref<1x8x32xf32, #tpu.memory_space<vmem>>, vector<1x8x32xf32>,
      %cst_45 = arith.constant 0.000000e+00 : f32
      %58 = vector.broadcast %cst_45 : f32 to vector<8x8xf32>
      %c0_46 = arith.constant 0 : index
      %c0_47 = arith.constant 0 : index
      %59 = vector.load %arg15[%c0_46, %c0_47] : memref<8x8xf32, #tpu.memory_space<vmem>>, vector<8x8xf32>
      tpu.vector_store %arg15[%c0_46, %c0_47], %58 {strides = array<i32>} : memref<8x8xf32, #tpu.memory_space<vmem>>, vector<8x8xf32>,
    } else {
    }
    %c0_25 = arith.constant 0 : index
    %c0_26 = arith.constant 0 : index
    %37 = vector.load %arg15[%c0_25, %c0_26] : memref<8x8xf32, #tpu.memory_space<vmem>>, vector<8x8xf32>
    %38 = arith.addf %37, %33 : vector<8x8xf32>
    %c0_27 = arith.constant 0 : index
    %c0_28 = arith.constant 0 : index
    %39 = vector.load %arg15[%c0_27, %c0_28] : memref<8x8xf32, #tpu.memory_space<vmem>>, vector<8x8xf32>
    tpu.vector_store %arg15[%c0_27, %c0_28], %38 {strides = array<i32>} : memref<8x8xf32, #tpu.memory_space<vmem>>, vector<8x8xf32>,
    %40 = arith.truncf %33 : vector<8x8xf32> to vector<8x8xbf16>
    %41 = arith.truncf %10 : vector<8x8xf32> to vector<8x8xbf16>
    %cst_29 = arith.constant dense<0.000000e+00> : vector<8x8xf32>
    %42 = tpu.matmul %40, %41, %cst_29 {dimension_numbers = #tpu.dot_dimension_numbers<[1], [0], [0], [1], [0, 0, 1, 1], [], []>} : vector<8x8xbf16>, vector<8x8xbf16>, vector<8x8xf32> -> vector<8x8xf32>
    %c0_30 = arith.constant 0 : index
    %c0_31 = arith.constant 0 : index
    %c0_32 = arith.constant 0 : index
    %43 = vector.load %arg13[%c0_30, %c0_31, %c0_32] : memref<1x8x32xf32, #tpu.memory_space<vmem>>, vector<1x8x32xf32>
    %44 = vector.shape_cast %43 : vector<1x8x32xf32> to vector<8x32xf32>
    %45 = arith.truncf %42 : vector<8x8xf32> to vector<8x8xbf16>
    %c0_33 = arith.constant 0 : index
    %c0_34 = arith.constant 0 : index
    %c0_35 = arith.constant 0 : index
    %46 = vector.load %arg11[%c0_33, %c0_34, %c0_35] : memref<1x8x32xbf16, #tpu.memory_space<vmem>>, vector<1x8x32xbf16>
    %47 = vector.shape_cast %46 : vector<1x8x32xbf16> to vector<8x32xbf16>
    %cst_36 = arith.constant dense<0.000000e+00> : vector<8x32xf32>
    %48 = tpu.matmul %45, %47, %cst_36 {dimension_numbers = #tpu.dot_dimension_numbers<[1], [0], [0], [1], [0, 0, 1, 1], [], []>} : vector<8x8xbf16>, vector<8x32xbf16>, vector<8x32xf32> -> vector<8x32xf32>
    %49 = arith.addf %44, %48 : vector<8x32xf32>
    %c0_37 = arith.constant 0 : index
    %c0_38 = arith.constant 0 : index
    %c0_39 = arith.constant 0 : index
    %50 = vector.load %arg13[%c0_37, %c0_38, %c0_39] : memref<1x8x32xf32, #tpu.memory_space<vmem>>, vector<1x8x32xf32>
    %51 = vector.shape_cast %50 : vector<1x8x32xf32> to vector<8x32xf32>
    %52 = vector.shape_cast %49 : vector<8x32xf32> to vector<1x8x32xf32>
    tpu.vector_store %arg13[%c0_37, %c0_38, %c0_39], %52 {strides = array<i32>} : memref<1x8x32xf32, #tpu.memory_space<vmem>>, vector<1x8x32xf32>,
    %c3_i32 = arith.constant 3 : i32
    %53 = arith.cmpi eq, %arg1, %c3_i32 : i32
    %54 = arith.extui %53 : i1 to i32
    %c0_i32_40 = arith.constant 0 : i32
    %55 = arith.cmpi ne, %54, %c0_i32_40 : i32
    scf.if %55 {
      %c0_41 = arith.constant 0 : index
      %c0_42 = arith.constant 0 : index
      %56 = vector.load %arg15[%c0_41, %c0_42] : memref<8x8xf32, #tpu.memory_space<vmem>>, vector<8x8xf32>
      %cst_43 = arith.constant 2.500000e-01 : f32
      %57 = vector.broadcast %cst_43 : f32 to vector<8x8xf32>
      %58 = arith.mulf %56, %57 : vector<8x8xf32>
      %c0_44 = arith.constant 0 : index
      %c0_45 = arith.constant 0 : index
      %59 = vector.load %arg12[%c0_44, %c0_45] : memref<32x32xbf16, #tpu.memory_space<vmem>>, vector<32x32xbf16>
      %cst_46 = arith.constant dense<0.000000e+00> : vector<8x32xf32>
      %60 = tpu.matmul %1, %59, %cst_46 {dimension_numbers = #tpu.dot_dimension_numbers<[1], [0], [0], [1], [0, 0, 1, 1], [], []>} : vector<8x32xbf16>, vector<32x32xbf16>, vector<8x32xf32> -> vector<8x32xf32>
      %61 = arith.truncf %60 : vector<8x32xf32> to vector<8x32xbf16>
      %c0_47 = arith.constant 0 : index
      %c0_48 = arith.constant 0 : index
      %c0_49 = arith.constant 0 : index
      %62 = vector.load %arg3[%c0_47, %c0_48, %c0_49] : memref<1x8x3xf32, #tpu.memory_space<vmem>>, vector<1x8x3xf32>
      %63 = vector.shape_cast %62 : vector<1x8x3xf32> to vector<8x3xf32>
      %c0_50 = arith.constant 0 : index
      %c0_51 = arith.constant 0 : index
      %c0_52 = arith.constant 0 : index
      %64 = vector.load %arg4[%c0_50, %c0_51, %c0_52] : memref<1x3x8xf32, #tpu.memory_space<vmem>>, vector<1x3x8xf32>
      %65 = vector.shape_cast %64 : vector<1x3x8xf32> to vector<3x8xf32>
      %66 = vector.extract_strided_slice %63 {offsets = [0, 0], sizes = [8, 1], strides = [1, 1]} : vector<8x3xf32> to vector<8x1xf32>
      %67 = vector.extract_strided_slice %65 {offsets = [0, 0], sizes = [1, 8], strides = [1, 1]} : vector<3x8xf32> to vector<1x8xf32>
      %68 = vector.broadcast %66 : vector<8x1xf32> to vector<8x8xf32>
      %69 = vector.broadcast %67 : vector<1x8xf32> to vector<8x8xf32>
      %70 = arith.subf %68, %69 : vector<8x8xf32>
      %71 = vector.extract_strided_slice %63 {offsets = [0, 1], sizes = [8, 1], strides = [1, 1]} : vector<8x3xf32> to vector<8x1xf32>
      %72 = vector.extract_strided_slice %65 {offsets = [1, 0], sizes = [1, 8], strides = [1, 1]} : vector<3x8xf32> to vector<1x8xf32>
      %73 = vector.broadcast %71 : vector<8x1xf32> to vector<8x8xf32>
      %74 = vector.broadcast %72 : vector<1x8xf32> to vector<8x8xf32>
      %75 = arith.subf %73, %74 : vector<8x8xf32>
      %76 = vector.extract_strided_slice %63 {offsets = [0, 2], sizes = [8, 1], strides = [1, 1]} : vector<8x3xf32> to vector<8x1xf32>
      %77 = vector.extract_strided_slice %65 {offsets = [2, 0], sizes = [1, 8], strides = [1, 1]} : vector<3x8xf32> to vector<1x8xf32>
      %78 = vector.broadcast %76 : vector<8x1xf32> to vector<8x8xf32>
      %79 = vector.broadcast %77 : vector<1x8xf32> to vector<8x8xf32>
      %80 = arith.subf %78, %79 : vector<8x8xf32>
      %81 = arith.mulf %70, %70 : vector<8x8xf32>
      %82 = arith.mulf %75, %75 : vector<8x8xf32>
      %83 = arith.addf %81, %82 : vector<8x8xf32>
      %84 = arith.mulf %80, %80 : vector<8x8xf32>
      %85 = arith.addf %83, %84 : vector<8x8xf32>
      %cst_53 = arith.constant 9.99999997E-7 : f32
      %86 = vector.broadcast %cst_53 : f32 to vector<8x8xf32>
      %87 = arith.addf %85, %86 : vector<8x8xf32>
      %88 = math.rsqrt %87 : vector<8x8xf32>
      %89 = arith.mulf %58, %88 : vector<8x8xf32>
      %90 = arith.mulf %89, %70 : vector<8x8xf32>
      %91 = arith.truncf %90 : vector<8x8xf32> to vector<8x8xbf16>
      %cst_54 = arith.constant dense<0.000000e+00> : vector<8x32xf32>
      %92 = tpu.matmul %91, %61, %cst_54 {dimension_numbers = #tpu.dot_dimension_numbers<[1], [0], [0], [1], [0, 0, 1, 1], [], []>} : vector<8x8xbf16>, vector<8x32xbf16>, vector<8x32xf32> -> vector<8x32xf32>
      %c0_55 = arith.constant 0 : index
      %c0_56 = arith.constant 0 : index
      %c0_57 = arith.constant 0 : index
      %c0_58 = arith.constant 0 : index
      %93 = vector.load %arg7[%c0_55, %c0_56, %c0_57, %c0_58] : memref<1x3x8x32xf32, #tpu.memory_space<vmem>>, vector<1x1x8x32xf32>
      %94 = vector.shape_cast %93 : vector<1x1x8x32xf32> to vector<8x32xf32>
      %95 = arith.addf %94, %92 : vector<8x32xf32>
      %c0_59 = arith.constant 0 : index
      %c0_60 = arith.constant 0 : index
      %c0_61 = arith.constant 0 : index
      %c0_62 = arith.constant 0 : index
      %96 = vector.load %arg14[%c0_59, %c0_60, %c0_61, %c0_62] : memref<1x3x8x32xf32, #tpu.memory_space<vmem>>, vector<1x1x8x32xf32>
      %97 = vector.shape_cast %96 : vector<1x1x8x32xf32> to vector<8x32xf32>
      %98 = vector.shape_cast %95 : vector<8x32xf32> to vector<1x1x8x32xf32>
      tpu.vector_store %arg14[%c0_59, %c0_60, %c0_61, %c0_62], %98 {strides = array<i32>} : memref<1x3x8x32xf32, #tpu.memory_space<vmem>>, vector<1x1x8x32xf32>,
      %99 = arith.mulf %89, %75 : vector<8x8xf32>
      %100 = arith.truncf %99 : vector<8x8xf32> to vector<8x8xbf16>
      %cst_63 = arith.constant dense<0.000000e+00> : vector<8x32xf32>
      %101 = tpu.matmul %100, %61, %cst_63 {dimension_numbers = #tpu.dot_dimension_numbers<[1], [0], [0], [1], [0, 0, 1, 1], [], []>} : vector<8x8xbf16>, vector<8x32xbf16>, vector<8x32xf32> -> vector<8x32xf32>
      %c0_64 = arith.constant 0 : index
      %c1 = arith.constant 1 : index
      %c0_65 = arith.constant 0 : index
      %c0_66 = arith.constant 0 : index
      %102 = vector.load %arg7[%c0_64, %c1, %c0_65, %c0_66] : memref<1x3x8x32xf32, #tpu.memory_space<vmem>>, vector<1x1x8x32xf32>
      %103 = vector.shape_cast %102 : vector<1x1x8x32xf32> to vector<8x32xf32>
      %104 = arith.addf %103, %101 : vector<8x32xf32>
      %c0_67 = arith.constant 0 : index
      %c1_68 = arith.constant 1 : index
      %c0_69 = arith.constant 0 : index
      %c0_70 = arith.constant 0 : index
      %105 = vector.load %arg14[%c0_67, %c1_68, %c0_69, %c0_70] : memref<1x3x8x32xf32, #tpu.memory_space<vmem>>, vector<1x1x8x32xf32>
      %106 = vector.shape_cast %105 : vector<1x1x8x32xf32> to vector<8x32xf32>
      %107 = vector.shape_cast %104 : vector<8x32xf32> to vector<1x1x8x32xf32>
      tpu.vector_store %arg14[%c0_67, %c1_68, %c0_69, %c0_70], %107 {strides = array<i32>} : memref<1x3x8x32xf32, #tpu.memory_space<vmem>>, vector<1x1x8x32xf32>,
      %108 = arith.mulf %89, %80 : vector<8x8xf32>
      %109 = arith.truncf %108 : vector<8x8xf32> to vector<8x8xbf16>
      %cst_71 = arith.constant dense<0.000000e+00> : vector<8x32xf32>
      %110 = tpu.matmul %109, %61, %cst_71 {dimension_numbers = #tpu.dot_dimension_numbers<[1], [0], [0], [1], [0, 0, 1, 1], [], []>} : vector<8x8xbf16>, vector<8x32xbf16>, vector<8x32xf32> -> vector<8x32xf32>
      %c0_72 = arith.constant 0 : index
      %c2 = arith.constant 2 : index
      %c0_73 = arith.constant 0 : index
      %c0_74 = arith.constant 0 : index
      %111 = vector.load %arg7[%c0_72, %c2, %c0_73, %c0_74] : memref<1x3x8x32xf32, #tpu.memory_space<vmem>>, vector<1x1x8x32xf32>
      %112 = vector.shape_cast %111 : vector<1x1x8x32xf32> to vector<8x32xf32>
      %113 = arith.addf %112, %110 : vector<8x32xf32>
      %c0_75 = arith.constant 0 : index
      %c2_76 = arith.constant 2 : index
      %c0_77 = arith.constant 0 : index
      %c0_78 = arith.constant 0 : index
      %114 = vector.load %arg14[%c0_75, %c2_76, %c0_77, %c0_78] : memref<1x3x8x32xf32, #tpu.memory_space<vmem>>, vector<1x1x8x32xf32>
      %115 = vector.shape_cast %114 : vector<1x1x8x32xf32> to vector<8x32xf32>
      %116 = vector.shape_cast %113 : vector<8x32xf32> to vector<1x1x8x32xf32>
      tpu.vector_store %arg14[%c0_75, %c2_76, %c0_77, %c0_78], %116 {strides = array<i32>} : memref<1x3x8x32xf32, #tpu.memory_space<vmem>>, vector<1x1x8x32xf32>,
    } else {
    }
    return
  }
  func.func @transform_0(%arg0: i32, %arg1: i32) -> (i32, i32, i32) {
    %c0_i32 = arith.constant 0 : i32
    %c0_i32_0 = arith.constant 0 : i32
    %c0_i32_1 = arith.constant 0 : i32
    return %arg0, %c0_i32, %c0_i32_0 : i32, i32, i32
  }
  func.func @transform_1(%arg0: i32, %arg1: i32) -> (i32, i32, i32) {
    %c0_i32 = arith.constant 0 : i32
    %c0_i32_0 = arith.constant 0 : i32
    %c0_i32_1 = arith.constant 0 : i32
    return %arg0, %c0_i32, %c0_i32_0 : i32, i32, i32
  }
  func.func @transform_2(%arg0: i32, %arg1: i32) -> (i32, i32, i32) {
    %c0_i32 = arith.constant 0 : i32
    %c0_i32_0 = arith.constant 0 : i32
    %c0_i32_1 = arith.constant 0 : i32
    return %arg0, %c0_i32, %c0_i32_0 : i32, i32, i32
  }
  func.func @transform_3(%arg0: i32, %arg1: i32) -> (i32, i32, i32, i32) {
    %c0_i32 = arith.constant 0 : i32
    %c0_i32_0 = arith.constant 0 : i32
    %c0_i32_1 = arith.constant 0 : i32
    return %arg0, %arg1, %c0_i32, %c0_i32_0 : i32, i32, i32, i32
  }
  func.func @transform_4(%arg0: i32, %arg1: i32) -> (i32, i32, i32) {
    %c0_i32 = arith.constant 0 : i32
    %c0_i32_0 = arith.constant 0 : i32
    %c0_i32_1 = arith.constant 0 : i32
    return %arg0, %c0_i32, %c0_i32_0 : i32, i32, i32
  }
  func.func @transform_5(%arg0: i32, %arg1: i32) -> (i32, i32, i32, i32) {
    %c0_i32 = arith.constant 0 : i32
    %c0_i32_0 = arith.constant 0 : i32
    %c0_i32_1 = arith.constant 0 : i32
    %c0_i32_2 = arith.constant 0 : i32
    return %arg0, %c0_i32, %c0_i32_0, %c0_i32_1 : i32, i32, i32, i32
  }
  func.func @transform_6(%arg0: i32, %arg1: i32) -> (i32, i32, i32) {
    %c0_i32 = arith.constant 0 : i32
    %c0_i32_0 = arith.constant 0 : i32
    %c0_i32_1 = arith.constant 0 : i32
    return %arg1, %c0_i32, %c0_i32_0 : i32, i32, i32
  }
  func.func @transform_7(%arg0: i32, %arg1: i32) -> (i32, i32, i32) {
    %c0_i32 = arith.constant 0 : i32
    %c0_i32_0 = arith.constant 0 : i32
    %c0_i32_1 = arith.constant 0 : i32
    return %arg1, %c0_i32, %c0_i32_0 : i32, i32, i32
  }
  func.func @transform_8(%arg0: i32, %arg1: i32) -> (i32, i32, i32) {
    %c0_i32 = arith.constant 0 : i32
    %c0_i32_0 = arith.constant 0 : i32
    %c0_i32_1 = arith.constant 0 : i32
    return %arg1, %c0_i32, %c0_i32_0 : i32, i32, i32
  }
  func.func @transform_9(%arg0: i32, %arg1: i32) -> (i32, i32, i32) {
    %c0_i32 = arith.constant 0 : i32
    %c0_i32_0 = arith.constant 0 : i32
    %c0_i32_1 = arith.constant 0 : i32
    return %arg1, %c0_i32, %c0_i32_0 : i32, i32, i32
  }
  func.func @transform_10(%arg0: i32, %arg1: i32) -> (i32, i32) {
    %c0_i32 = arith.constant 0 : i32
    %c0_i32_0 = arith.constant 0 : i32
    %c0_i32_1 = arith.constant 0 : i32
    return %c0_i32, %c0_i32_0 : i32, i32
  }
  func.func @transform_11(%arg0: i32, %arg1: i32) -> (i32, i32, i32) {
    %c0_i32 = arith.constant 0 : i32
    %c0_i32_0 = arith.constant 0 : i32
    %c0_i32_1 = arith.constant 0 : i32
    return %arg0, %c0_i32, %c0_i32_0 : i32, i32, i32
  }
  func.func @transform_12(%arg0: i32, %arg1: i32) -> (i32, i32, i32, i32) {
    %c0_i32 = arith.constant 0 : i32
    %c0_i32_0 = arith.constant 0 : i32
    %c0_i32_1 = arith.constant 0 : i32
    %c0_i32_2 = arith.constant 0 : i32
    return %arg0, %c0_i32, %c0_i32_0, %c0_i32_1 : i32, i32, i32, i32
  }
}

</mosaic_0001>

<llo_original>
// kernel: tpu_custom_call.1
$region0: #{tpu_custom_call.1}
  #allocation0 [shape = 'u32[]', space=smem, size = 0x4, offset = 0x4, fixed_abs, tag = 'smem constant byte address 0x4 - core index']
  #allocation1 [shape = 'u32[144,128]{1,0:T(1,128)}', space=vmem, size = 0x12000, scoped, tag = 'internal scratch']
  #allocation2 [shape = 'f32[8,8]{1,0:T(8,128)}', space=vmem, size = 0x1000, scoped, tag = 'scratch operand']
  %s0 = inlined_call_operand.vmem [shape: bf16[2,8,32], index: 0, kind: input, shape index: {}]
  %s1 = inlined_call_operand.vmem [shape: f32[2,8,3], index: 1, kind: input, shape index: {}]
  %s2 = inlined_call_operand.vmem [shape: f32[2,3,8], index: 2, kind: input, shape index: {}]
  %s3 = inlined_call_operand.vmem [shape: bf16[2,4,8,8], index: 3, kind: input, shape index: {}]
  %s4 = inlined_call_operand.vmem [shape: f32[2,1,8], index: 4, kind: input, shape index: {}]
  %s5 = inlined_call_operand.hbm [shape: f32[2,3,8,32], index: 5, kind: input, shape index: {}, may-alias: {5,12}]
  %s6 = inlined_call_operand.vmem [shape: bf16[4,32,8], index: 6, kind: input, shape index: {}]
  %s7 = inlined_call_operand.vmem [shape: bf16[4,32,8], index: 7, kind: input, shape index: {}]
  %s8 = inlined_call_operand.vmem [shape: bf16[4,32,8], index: 8, kind: input, shape index: {}]
  %s9 = inlined_call_operand.vmem [shape: bf16[4,8,32], index: 9, kind: input, shape index: {}]
  %s10 = inlined_call_operand.vmem [shape: bf16[32,32], index: 10, kind: input, shape index: {}]
  %s11 = inlined_call_operand.hbm [shape: f32[2,8,32], index: 11, kind: output, shape index: {0}]
  %s12 = inlined_call_operand.hbm [shape: f32[2,3,8,32], index: 12, kind: output, shape index: {1}, may-alias: {5,12}]
  %13 = xla_tuple %s11, %s12
  %s14 = sld [smem:[#allocation0]]
  $region97: #{tpu_custom_call.1} parent=0
    _
  %s16 = ssub.s32 1, %s14
  %s17 = scalar_select 0, %s16, %s14
  $region1: #{tpu_custom_call.1} parent=0
    #allocation3 [shape = 'u8[24576]{0}', space=vmem, size = 0x6000, scoped, tag = 'input window, operand 5']
    #allocation4 [shape = 's32[2]{0}', space=sflag, size = 0x8, scoped, tag = 'scoped memory for tpu_custom_call.1']
    #allocation5 [shape = 's32[2]{0}', space=sflag, size = 0x8, scoped, tag = 'scoped memory for tpu_custom_call.1']
    #allocation6 [shape = 'u8[8192]{0}', space=vmem, size = 0x2000, scoped, tag = 'output window, operand 0']
    #allocation7 [shape = 'u8[24576]{0}', space=vmem, size = 0x6000, scoped, tag = 'output window, operand 1']
    #allocation8 [shape = 's32[2]{0}', space=sflag, size = 0x8, scoped, tag = 'scoped memory for tpu_custom_call.1']
    %18 = vsyncpa [#allocation4], 0
    %s19 = scalar_lea.sflag [#allocation4], 1
    %20 = vsyncpa %s19, 0
    %21 = vsyncpa [#allocation5], 0
    %s22 = scalar_lea.sflag [#allocation5], 1
    %23 = vsyncpa %s22, 0
    %24 = vsyncpa [#allocation8], 0
    %s25 = scalar_lea.sflag [#allocation8], 1
    %26 = vsyncpa %s25, 0
    loop: start=0, step=1, limit=10
    $region2: #{tpu_custom_call.1} parent=1 // loop_pre_header
      _
    $region3: #{tpu_custom_call.1} parent=1 // loop_header
      %s28 = sphi 0, %s32
      %p29 = scmp.ge.s32.totalorder %s28, 10
      %s35 = sphi 0, %s47
      %s36 = sphi 0, %s43
      %s37 = sphi 0, %s35
      %s38 = sphi 0, %s36
      %s39 = sphi 0, %s37
      %s40 = sphi 0, %s38
      %s50 = sphi 0, %s52
      %s53 = sphi 0, %s50
      %s54 = sphi 0, %s53
      %s70 = sphi 0, %s54
      %s76 = sphi 0, %s78
      %s79 = sphi 0, %s76
      %s80 = sphi 0, %s79
      %s96 = sphi 0, %s80
      %s102 = sphi 0, %s104
      %s105 = sphi 0, %s102
      %s106 = sphi 0, %s105
      %s122 = sphi 0, %s106
      %s130 = sphi 0, %s132
      %s133 = sphi 0, %s130
      %s134 = sphi 0, %s133
      %s150 = sphi 0, %s134
      %s156 = sphi 0, %s158
      %s159 = sphi 0, %s156
      %s160 = sphi 0, %s159
      %s176 = sphi 0, %s160
      %s182 = sphi 0, %s184
      %s185 = sphi 0, %s182
      %s186 = sphi 0, %s185
      %s202 = sphi 0, %s186
      %s208 = sphi 0, %s210
      %s211 = sphi 0, %s208
      %s212 = sphi 0, %s211
      %s228 = sphi 0, %s212
      %s234 = sphi 0, %s236
      %s237 = sphi 0, %s234
      %s238 = sphi 0, %s237
      %s254 = sphi 0, %s238
      %s260 = sphi 0, %s262
      %s263 = sphi 0, %s260
      %s264 = sphi 0, %s263
      %s280 = sphi 0, %s264
      %s286 = sphi 0, %s288
      %s289 = sphi 0, %s286
      %s290 = sphi 0, %s289
      %s306 = sphi 0, %s290
      %s310 = sphi 0, %s310
      %s312 = sphi 0, %s310
      %s313 = sphi 0, %s312
      %s327 = sphi 0, %s313
      %s333 = sphi 0, %s335
      %s336 = sphi 0, %s333
      %s337 = sphi 0, %s336
      %s353 = sphi 0, %s337
      %s359 = sphi 0, %s361
      %s362 = sphi 0, %s359
      %s363 = sphi 0, %s362
      %s379 = sphi 0, %s363
    $region4: #{tpu_custom_call.1} parent=1 // loop_header_branch
      %31 = sbr.rel (%p29) target = $region8
    $region5: #{tpu_custom_call.1} parent=1 // loop_body
      %s33 = ssub.s32 %s28, 1
      %s34 = ssub.s32 %s28, 2
      %s41 = sadd.s32 1, %s36
      %p42 = scmp.ge.s32.totalorder %s41, 4
      %s43 = scalar_select %p42, 0, %s41
      %s44 = sadd.s32 1, %s35
      %s45 = scalar_select %p42, %s44, %s35
      %p46 = scmp.ge.s32.totalorder %s45, 2
      %s47 = scalar_select %p46, 0, %s45
      %s48 = ssub.s32 %s35, %s47
      %p49 = scmp.eq.s32.totalorder %s48, 0
      %s51 = sadd.s32 %s50, 1
      %s52 = scalar_select %p49, %s50, %s51
      %p55 = pneg %p49
      %p56 = scmp.eq.s32.totalorder %s28, 7
      %p57 = por %p55, %p56
      %p58 = scmp.ne.s32.totalorder %s50, %s53
      %p59 = scmp.eq.s32.totalorder %s28, 0
      %p60 = por %p58, %p59
      %p61 = scmp.ne.s32.totalorder %s50, %s53
      %p62 = scmp.eq.s32.totalorder %s33, 7
      %p63 = por %p61, %p62
      %p64 = scmp.ne.s32.totalorder %s53, %s54
      %p65 = scmp.eq.s32.totalorder %s33, 0
      %p66 = por %p64, %p65
      %p67 = scmp.ne.s32.totalorder %s53, %s54
      %p68 = scmp.eq.s32.totalorder %s34, 7
      %p69 = por %p67, %p68
      %p71 = scmp.ne.s32.totalorder %s54, %s70
      %p72 = scmp.eq.s32.totalorder %s34, 0
      %p73 = por %p71, %p72
      %s74 = ssub.s32 %s35, %s47
      %p75 = scmp.eq.s32.totalorder %s74, 0
      %s77 = sadd.s32 %s76, 1
      %s78 = scalar_select %p75, %s76, %s77
      %p81 = pneg %p75
      %p82 = scmp.eq.s32.totalorder %s28, 7
      %p83 = por %p81, %p82
      %p84 = scmp.ne.s32.totalorder %s76, %s79
      %p85 = scmp.eq.s32.totalorder %s28, 0
      %p86 = por %p84, %p85
      %p87 = scmp.ne.s32.totalorder %s76, %s79
      %p88 = scmp.eq.s32.totalorder %s33, 7
      %p89 = por %p87, %p88
      %p90 = scmp.ne.s32.totalorder %s79, %s80
      %p91 = scmp.eq.s32.totalorder %s33, 0
      %p92 = por %p90, %p91
      %p93 = scmp.ne.s32.totalorder %s79, %s80
      %p94 = scmp.eq.s32.totalorder %s34, 7
      %p95 = por %p93, %p94
      %p97 = scmp.ne.s32.totalorder %s80, %s96
      %p98 = scmp.eq.s32.totalorder %s34, 0
      %p99 = por %p97, %p98
      %s100 = ssub.s32 %s35, %s47
      %p101 = scmp.eq.s32.totalorder %s100, 0
      %s103 = sadd.s32 %s102, 1
      %s104 = scalar_select %p101, %s102, %s103
      %p107 = pneg %p101
      %p108 = scmp.eq.s32.totalorder %s28, 7
      %p109 = por %p107, %p108
      %p110 = scmp.ne.s32.totalorder %s102, %s105
      %p111 = scmp.eq.s32.totalorder %s28, 0
      %p112 = por %p110, %p111
      %p113 = scmp.ne.s32.totalorder %s102, %s105
      %p114 = scmp.eq.s32.totalorder %s33, 7
      %p115 = por %p113, %p114
      %p116 = scmp.ne.s32.totalorder %s105, %s106
      %p117 = scmp.eq.s32.totalorder %s33, 0
      %p118 = por %p116, %p117
      %p119 = scmp.ne.s32.totalorder %s105, %s106
      %p120 = scmp.eq.s32.totalorder %s34, 7
      %p121 = por %p119, %p120
      %p123 = scmp.ne.s32.totalorder %s106, %s122
      %p124 = scmp.eq.s32.totalorder %s34, 0
      %p125 = por %p123, %p124
      %s126 = ssub.s32 %s35, %s47
      %s127 = ssub.s32 %s36, %s43
      %s128 = sor.u32 %s126, %s127
      %p129 = scmp.eq.s32.totalorder %s128, 0
      %s131 = sadd.s32 %s130, 1
      %s132 = scalar_select %p129, %s130, %s131
      %p135 = pneg %p129
      %p136 = scmp.eq.s32.totalorder %s28, 7
      %p137 = por %p135, %p136
      %p138 = scmp.ne.s32.totalorder %s130, %s133
      %p139 = scmp.eq.s32.totalorder %s28, 0
      %p140 = por %p138, %p139
      %p141 = scmp.ne.s32.totalorder %s130, %s133
      %p142 = scmp.eq.s32.totalorder %s33, 7
      %p143 = por %p141, %p142
      %p144 = scmp.ne.s32.totalorder %s133, %s134
      %p145 = scmp.eq.s32.totalorder %s33, 0
      %p146 = por %p144, %p145
      %p147 = scmp.ne.s32.totalorder %s133, %s134
      %p148 = scmp.eq.s32.totalorder %s34, 7
      %p149 = por %p147, %p148
      %p151 = scmp.ne.s32.totalorder %s134, %s150
      %p152 = scmp.eq.s32.totalorder %s34, 0
      %p153 = por %p151, %p152
      %s154 = ssub.s32 %s35, %s47
      %p155 = scmp.eq.s32.totalorder %s154, 0
      %s157 = sadd.s32 %s156, 1
      %s158 = scalar_select %p155, %s156, %s157
      %p161 = pneg %p155
      %p162 = scmp.eq.s32.totalorder %s28, 7
      %p163 = por %p161, %p162
      %p164 = scmp.ne.s32.totalorder %s156, %s159
      %p165 = scmp.eq.s32.totalorder %s28, 0
      %p166 = por %p164, %p165
      %p167 = scmp.ne.s32.totalorder %s156, %s159
      %p168 = scmp.eq.s32.totalorder %s33, 7
      %p169 = por %p167, %p168
      %p170 = scmp.ne.s32.totalorder %s159, %s160
      %p171 = scmp.eq.s32.totalorder %s33, 0
      %p172 = por %p170, %p171
      %p173 = scmp.ne.s32.totalorder %s159, %s160
      %p174 = scmp.eq.s32.totalorder %s34, 7
      %p175 = por %p173, %p174
      %p177 = scmp.ne.s32.totalorder %s160, %s176
      %p178 = scmp.eq.s32.totalorder %s34, 0
      %p179 = por %p177, %p178
      %s180 = ssub.s32 %s35, %s47
      %p181 = scmp.eq.s32.totalorder %s180, 0
      %s183 = sadd.s32 %s182, 1
      %s184 = scalar_select %p181, %s182, %s183
      %p187 = pneg %p181
      %p188 = scmp.eq.s32.totalorder %s28, 7
      %p189 = por %p187, %p188
      %p190 = scmp.ne.s32.totalorder %s182, %s185
      %p191 = scmp.eq.s32.totalorder %s28, 0
      %p192 = por %p190, %p191
      %p193 = scmp.ne.s32.totalorder %s182, %s185
      %p194 = scmp.eq.s32.totalorder %s33, 7
      %p195 = por %p193, %p194
      %p196 = scmp.ne.s32.totalorder %s185, %s186
      %p197 = scmp.eq.s32.totalorder %s33, 0
      %p198 = por %p196, %p197
      %p199 = scmp.ne.s32.totalorder %s185, %s186
      %p200 = scmp.eq.s32.totalorder %s34, 7
      %p201 = por %p199, %p200
      %p203 = scmp.ne.s32.totalorder %s186, %s202
      %p204 = scmp.eq.s32.totalorder %s34, 0
      %p205 = por %p203, %p204
      %s206 = ssub.s32 %s36, %s43
      %p207 = scmp.eq.s32.totalorder %s206, 0
      %s209 = sadd.s32 %s208, 1
      %s210 = scalar_select %p207, %s208, %s209
      %p213 = pneg %p207
      %p214 = scmp.eq.s32.totalorder %s28, 7
      %p215 = por %p213, %p214
      %p216 = scmp.ne.s32.totalorder %s208, %s211
      %p217 = scmp.eq.s32.totalorder %s28, 0
      %p218 = por %p216, %p217
      %p219 = scmp.ne.s32.totalorder %s208, %s211
      %p220 = scmp.eq.s32.totalorder %s33, 7
      %p221 = por %p219, %p220
      %p222 = scmp.ne.s32.totalorder %s211, %s212
      %p223 = scmp.eq.s32.totalorder %s33, 0
      %p224 = por %p222, %p223
      %p225 = scmp.ne.s32.totalorder %s211, %s212
      %p226 = scmp.eq.s32.totalorder %s34, 7
      %p227 = por %p225, %p226
      %p229 = scmp.ne.s32.totalorder %s212, %s228
      %p230 = scmp.eq.s32.totalorder %s34, 0
      %p231 = por %p229, %p230
      %s232 = ssub.s32 %s36, %s43
      %p233 = scmp.eq.s32.totalorder %s232, 0
      %s235 = sadd.s32 %s234, 1
      %s236 = scalar_select %p233, %s234, %s235
      %p239 = pneg %p233
      %p240 = scmp.eq.s32.totalorder %s28, 7
      %p241 = por %p239, %p240
      %p242 = scmp.ne.s32.totalorder %s234, %s237
      %p243 = scmp.eq.s32.totalorder %s28, 0
      %p244 = por %p242, %p243
      %p245 = scmp.ne.s32.totalorder %s234, %s237
      %p246 = scmp.eq.s32.totalorder %s33, 7
      %p247 = por %p245, %p246
      %p248 = scmp.ne.s32.totalorder %s237, %s238
      %p249 = scmp.eq.s32.totalorder %s33, 0
      %p250 = por %p248, %p249
      %p251 = scmp.ne.s32.totalorder %s237, %s238
      %p252 = scmp.eq.s32.totalorder %s34, 7
      %p253 = por %p251, %p252
      %p255 = scmp.ne.s32.totalorder %s238, %s254
      %p256 = scmp.eq.s32.totalorder %s34, 0
      %p257 = por %p255, %p256
      %s258 = ssub.s32 %s36, %s43
      %p259 = scmp.eq.s32.totalorder %s258, 0
      %s261 = sadd.s32 %s260, 1
      %s262 = scalar_select %p259, %s260, %s261
      %p265 = pneg %p259
      %p266 = scmp.eq.s32.totalorder %s28, 7
      %p267 = por %p265, %p266
      %p268 = scmp.ne.s32.totalorder %s260, %s263
      %p269 = scmp.eq.s32.totalorder %s28, 0
      %p270 = por %p268, %p269
      %p271 = scmp.ne.s32.totalorder %s260, %s263
      %p272 = scmp.eq.s32.totalorder %s33, 7
      %p273 = por %p271, %p272
      %p274 = scmp.ne.s32.totalorder %s263, %s264
      %p275 = scmp.eq.s32.totalorder %s33, 0
      %p276 = por %p274, %p275
      %p277 = scmp.ne.s32.totalorder %s263, %s264
      %p278 = scmp.eq.s32.totalorder %s34, 7
      %p279 = por %p277, %p278
      %p281 = scmp.ne.s32.totalorder %s264, %s280
      %p282 = scmp.eq.s32.totalorder %s34, 0
      %p283 = por %p281, %p282
      %s284 = ssub.s32 %s36, %s43
      %p285 = scmp.eq.s32.totalorder %s284, 0
      %s287 = sadd.s32 %s286, 1
      %s288 = scalar_select %p285, %s286, %s287
      %p291 = pneg %p285
      %p292 = scmp.eq.s32.totalorder %s28, 7
      %p293 = por %p291, %p292
      %p294 = scmp.ne.s32.totalorder %s286, %s289
      %p295 = scmp.eq.s32.totalorder %s28, 0
      %p296 = por %p294, %p295
      %p297 = scmp.ne.s32.totalorder %s286, %s289
      %p298 = scmp.eq.s32.totalorder %s33, 7
      %p299 = por %p297, %p298
      %p300 = scmp.ne.s32.totalorder %s289, %s290
      %p301 = scmp.eq.s32.totalorder %s33, 0
      %p302 = por %p300, %p301
      %p303 = scmp.ne.s32.totalorder %s289, %s290
      %p304 = scmp.eq.s32.totalorder %s34, 7
      %p305 = por %p303, %p304
      %p307 = scmp.ne.s32.totalorder %s290, %s306
      %p308 = scmp.eq.s32.totalorder %s34, 0
      %p309 = por %p307, %p308
      %s311 = sadd.s32 %s310, 1
      %p314 = scmp.eq.s32.totalorder %s28, 7
      %p315 = scmp.ne.s32.totalorder %s310, %s312
      %p316 = scmp.eq.s32.totalorder %s28, 0
      %p317 = por %p315, %p316
      %p318 = scmp.ne.s32.totalorder %s310, %s312
      %p319 = scmp.eq.s32.totalorder %s33, 7
      %p320 = por %p318, %p319
      %p321 = scmp.ne.s32.totalorder %s312, %s313
      %p322 = scmp.eq.s32.totalorder %s33, 0
      %p323 = por %p321, %p322
      %p324 = scmp.ne.s32.totalorder %s312, %s313
      %p325 = scmp.eq.s32.totalorder %s34, 7
      %p326 = por %p324, %p325
      %p328 = scmp.ne.s32.totalorder %s313, %s327
      %p329 = scmp.eq.s32.totalorder %s34, 0
      %p330 = por %p328, %p329
      %s331 = ssub.s32 %s35, %s47
      %p332 = scmp.eq.s32.totalorder %s331, 0
      %s334 = sadd.s32 %s333, 1
      %s335 = scalar_select %p332, %s333, %s334
      %p338 = pneg %p332
      %p339 = scmp.eq.s32.totalorder %s28, 7
      %p340 = por %p338, %p339
      %p341 = scmp.ne.s32.totalorder %s333, %s336
      %p342 = scmp.eq.s32.totalorder %s28, 0
      %p343 = por %p341, %p342
      %p344 = scmp.ne.s32.totalorder %s333, %s336
      %p345 = scmp.eq.s32.totalorder %s33, 7
      %p346 = por %p344, %p345
      %p347 = scmp.ne.s32.totalorder %s336, %s337
      %p348 = scmp.eq.s32.totalorder %s33, 0
      %p349 = por %p347, %p348
      %p350 = scmp.ne.s32.totalorder %s336, %s337
      %p351 = scmp.eq.s32.totalorder %s34, 7
      %p352 = por %p350, %p351
      %p354 = scmp.ne.s32.totalorder %s337, %s353
      %p355 = scmp.eq.s32.totalorder %s34, 0
      %p356 = por %p354, %p355
      %s357 = ssub.s32 %s35, %s47
      %p358 = scmp.eq.s32.totalorder %s357, 0
      %s360 = sadd.s32 %s359, 1
      %s361 = scalar_select %p358, %s359, %s360
      %p364 = pneg %p358
      %p365 = scmp.eq.s32.totalorder %s28, 7
      %p366 = por %p364, %p365
      %p367 = scmp.ne.s32.totalorder %s359, %s362
      %p368 = scmp.eq.s32.totalorder %s28, 0
      %p369 = por %p367, %p368
      %p370 = scmp.ne.s32.totalorder %s359, %s362
      %p371 = scmp.eq.s32.totalorder %s33, 7
      %p372 = por %p370, %p371
      %p373 = scmp.ne.s32.totalorder %s362, %s363
      %p374 = scmp.eq.s32.totalorder %s33, 0
      %p375 = por %p373, %p374
      %p376 = scmp.ne.s32.totalorder %s362, %s363
      %p377 = scmp.eq.s32.totalorder %s34, 7
      %p378 = por %p376, %p377
      %p380 = scmp.ne.s32.totalorder %s363, %s379
      %p381 = scmp.eq.s32.totalorder %s34, 0
      %p382 = por %p380, %p381
      %p383 = scmp.le.s32.totalorder 1, %s28
      %p384 = scmp.lt.s32.totalorder %s28, 9
      %p385 = pnand %p383, %p384
      %p386 = pneg %p385
      // Predicated region
      $region9: #{tpu_custom_call.1} parent=5 // pred_check
        _
      $region10: #{tpu_custom_call.1} parent=5 // pred_check_branch
        %388 = sbr.rel (%p385) target = $region12
      $region11: #{tpu_custom_call.1} parent=5 // pred_region
        %s389 = ssub.s32 %s28, 1
        // Predicated region
        $region13: #{tpu_custom_call.1} parent=11 // pred_check
          %p390 = pneg %p323
        $region14: #{tpu_custom_call.1} parent=11 // pred_check_branch
          %392 = sbr.rel (%p390) target = $region16
        $region15: #{tpu_custom_call.1} parent=11 // pred_region
          _
        $region16: #{tpu_custom_call.1} parent=11 // pred_fallthru
          _
      $region12: #{tpu_custom_call.1} parent=5 // pred_fallthru
        _
      %p393 = scmp.lt.s32.totalorder %s28, 8
      // Predicated region
      $region17: #{tpu_custom_call.1} parent=5 // pred_check
        %p394 = pneg %p393
      $region18: #{tpu_custom_call.1} parent=5 // pred_check_branch
        %396 = sbr.rel (%p394) target = $region20
      $region19: #{tpu_custom_call.1} parent=5 // pred_region
        // Predicated region
        $region21: #{tpu_custom_call.1} parent=19 // pred_check
          %p397 = pneg %p60
        $region22: #{tpu_custom_call.1} parent=19 // pred_check_branch
          %399 = sbr.rel (%p397) target = $region24
        $region23: #{tpu_custom_call.1} parent=19 // pred_region
          %p400 = scmp.lt.s32.totalorder %s35, 1
          %s401 = scalar_select %p400, %s35, 1
          %s402 = smul.addr %s401, 4
          %s403 = scalar_lea.vmem %s0, %s402
        $region24: #{tpu_custom_call.1} parent=19 // pred_fallthru
          _
        // Predicated region
        $region25: #{tpu_custom_call.1} parent=19 // pred_check
          %p404 = pneg %p86
        $region26: #{tpu_custom_call.1} parent=19 // pred_check_branch
          %406 = sbr.rel (%p404) target = $region28
        $region27: #{tpu_custom_call.1} parent=19 // pred_region
          %p407 = scmp.lt.s32.totalorder %s35, 1
          %s408 = scalar_select %p407, %s35, 1
          %s409 = smul.addr %s408, 8
          %s410 = scalar_lea.vmem %s1, %s409
        $region28: #{tpu_custom_call.1} parent=19 // pred_fallthru
          _
        // Predicated region
        $region29: #{tpu_custom_call.1} parent=19 // pred_check
          %p411 = pneg %p112
        $region30: #{tpu_custom_call.1} parent=19 // pred_check_branch
          %413 = sbr.rel (%p411) target = $region32
        $region31: #{tpu_custom_call.1} parent=19 // pred_region
          %p414 = scmp.lt.s32.totalorder %s35, 1
          %s415 = scalar_select %p414, %s35, 1
          %s416 = smul.addr %s415, 4
          %s417 = scalar_lea.vmem %s2, %s416
        $region32: #{tpu_custom_call.1} parent=19 // pred_fallthru
          _
        // Predicated region
        $region33: #{tpu_custom_call.1} parent=19 // pred_check
          %p418 = pneg %p140
        $region34: #{tpu_custom_call.1} parent=19 // pred_check_branch
          %420 = sbr.rel (%p418) target = $region36
        $region35: #{tpu_custom_call.1} parent=19 // pred_region
          %p421 = scmp.lt.s32.totalorder %s35, 1
          %s422 = scalar_select %p421, %s35, 1
          %p423 = scmp.lt.s32.totalorder %s36, 3
          %s424 = scalar_select %p423, %s36, 3
          %s425 = smul.addr %s422, 4
          %s426 = sadd.s32 %s424, %s425
          %s427 = smul.addr %s426, 4
          %s428 = scalar_lea.vmem %s3, %s427
        $region36: #{tpu_custom_call.1} parent=19 // pred_fallthru
          _
        // Predicated region
        $region37: #{tpu_custom_call.1} parent=19 // pred_check
          %p429 = pneg %p166
        $region38: #{tpu_custom_call.1} parent=19 // pred_check_branch
          %431 = sbr.rel (%p429) target = $region40
        $region39: #{tpu_custom_call.1} parent=19 // pred_region
          %p432 = scmp.lt.s32.totalorder %s35, 1
          %s433 = scalar_select %p432, %s35, 1
          %s434 = scalar_lea.vmem %s4, %s433
        $region40: #{tpu_custom_call.1} parent=19 // pred_fallthru
          _
        // Predicated region
        $region41: #{tpu_custom_call.1} parent=19 // pred_check
          %p435 = pneg %p192
        $region42: #{tpu_custom_call.1} parent=19 // pred_check_branch
          %437 = sbr.rel (%p435) target = $region44
        $region43: #{tpu_custom_call.1} parent=19 // pred_region
          %s438 = sand.u32 %s182, 1
          %s439 = scalar_lea.sflag [#allocation4], %s438
          %s440 = sand.u32 %s182, 1
          %s441 = smul.addr %s440, 24
          %s442 = scalar_lea.vmem [#allocation3], %s441
          %s444 = ssub.s32 384, 384
          %445 = vsyncadd %s439, %s444
          %s446 = smul.addr %s35, 3
          %s447 = smul.addr %s446, 128
          %s448 = scalar_lea.hbm %s5, %s447
          %s449 = sshll.u32 %s442, 4
          %s450 = int_to_ptr.vmem [resolvable:$true] %s449
          %455 = dma.hbm_to_vmem [thread:$0]  %s448, 384, %s450, %s439, 128, 128, 8
        $region44: #{tpu_custom_call.1} parent=19 // pred_fallthru
          _
        // Predicated region
        $region45: #{tpu_custom_call.1} parent=19 // pred_check
          %p456 = pneg %p218
        $region46: #{tpu_custom_call.1} parent=19 // pred_check_branch
          %458 = sbr.rel (%p456) target = $region48
        $region47: #{tpu_custom_call.1} parent=19 // pred_region
          %p459 = scmp.lt.s32.totalorder %s36, 3
          %s460 = scalar_select %p459, %s36, 3
          %s461 = smul.addr %s460, 4
          %s462 = smul.addr %s461, 4
          %s463 = scalar_lea.vmem %s6, %s462
        $region48: #{tpu_custom_call.1} parent=19 // pred_fallthru
          _
        // Predicated region
        $region49: #{tpu_custom_call.1} parent=19 // pred_check
          %p464 = pneg %p244
        $region50: #{tpu_custom_call.1} parent=19 // pred_check_branch
          %466 = sbr.rel (%p464) target = $region52
        $region51: #{tpu_custom_call.1} parent=19 // pred_region
          %p467 = scmp.lt.s32.totalorder %s36, 3
          %s468 = scalar_select %p467, %s36, 3
          %s469 = smul.addr %s468, 4
          %s470 = smul.addr %s469, 4
          %s471 = scalar_lea.vmem %s7, %s470
        $region52: #{tpu_custom_call.1} parent=19 // pred_fallthru
          _
        // Predicated region
        $region53: #{tpu_custom_call.1} parent=19 // pred_check
          %p472 = pneg %p270
        $region54: #{tpu_custom_call.1} parent=19 // pred_check_branch
          %474 = sbr.rel (%p472) target = $region56
        $region55: #{tpu_custom_call.1} parent=19 // pred_region
          %p475 = scmp.lt.s32.totalorder %s36, 3
          %s476 = scalar_select %p475, %s36, 3
          %s477 = smul.addr %s476, 4
          %s478 = smul.addr %s477, 4
          %s479 = scalar_lea.vmem %s8, %s478
        $region56: #{tpu_custom_call.1} parent=19 // pred_fallthru
          _
        // Predicated region
        $region57: #{tpu_custom_call.1} parent=19 // pred_check
          %p480 = pneg %p296
        $region58: #{tpu_custom_call.1} parent=19 // pred_check_branch
          %482 = sbr.rel (%p480) target = $region60
        $region59: #{tpu_custom_call.1} parent=19 // pred_region
          %p483 = scmp.lt.s32.totalorder %s36, 3
          %s484 = scalar_select %p483, %s36, 3
          %s485 = smul.addr %s484, 4
          %s486 = scalar_lea.vmem %s9, %s485
        $region60: #{tpu_custom_call.1} parent=19 // pred_fallthru
          _
      $region20: #{tpu_custom_call.1} parent=5 // pred_fallthru
        _
      %p487 = scmp.le.s32.totalorder 1, %s28
      %p488 = scmp.lt.s32.totalorder %s28, 9
      %p489 = pnand %p487, %p488
      %p490 = pneg %p489
      // Predicated region
      $region61: #{tpu_custom_call.1} parent=5 // pred_check
        _
      $region62: #{tpu_custom_call.1} parent=5 // pred_check_branch
        %492 = sbr.rel (%p489) target = $region64
      $region63: #{tpu_custom_call.1} parent=5 // pred_region
        %s493 = ssub.s32 %s28, 1
        %s494 = sand.u32 %s185, 1
        %s495 = scalar_lea.sflag [#allocation4], %s494
        %s496 = sand.u32 %s185, 1
        %s497 = smul.addr %s496, 24
        %s498 = scalar_lea.vmem [#allocation3], %s497
        // Predicated region
        $region65: #{tpu_custom_call.1} parent=63 // pred_check
          %p499 = pneg %p198
        $region66: #{tpu_custom_call.1} parent=63 // pred_check_branch
          %501 = sbr.rel (%p499) target = $region68
        $region67: #{tpu_custom_call.1} parent=63 // pred_region
          %502 = dma.done %s495, 384
        $region68: #{tpu_custom_call.1} parent=63 // pred_fallthru
          _
        %p503 = scmp.lt.s32.totalorder %s37, 1
        %s504 = scalar_select %p503, %s37, 1
        %s505 = smul.addr %s504, 4
        %s506 = scalar_lea.vmem %s0, %s505
        %p507 = pneg %p66
        %p508 = pneg %p63
        %p509 = scmp.lt.s32.totalorder %s37, 1
        %s510 = scalar_select %p509, %s37, 1
        %s511 = smul.addr %s510, 8
        %s512 = scalar_lea.vmem %s1, %s511
        %p513 = pneg %p92
        %p514 = pneg %p89
        %p515 = scmp.lt.s32.totalorder %s37, 1
        %s516 = scalar_select %p515, %s37, 1
        %s517 = smul.addr %s516, 4
        %s518 = scalar_lea.vmem %s2, %s517
        %p519 = pneg %p118
        %p520 = pneg %p115
        %p521 = scmp.lt.s32.totalorder %s37, 1
        %s522 = scalar_select %p521, %s37, 1
        %p523 = scmp.lt.s32.totalorder %s38, 3
        %s524 = scalar_select %p523, %s38, 3
        %s525 = smul.addr %s522, 4
        %s526 = sadd.s32 %s524, %s525
        %s527 = smul.addr %s526, 4
        %s528 = scalar_lea.vmem %s3, %s527
        %p529 = pneg %p146
        %p530 = pneg %p143
        %p531 = scmp.lt.s32.totalorder %s37, 1
        %s532 = scalar_select %p531, %s37, 1
        %s533 = scalar_lea.vmem %s4, %s532
        %p534 = pneg %p172
        %p535 = pneg %p169
        %s536 = sand.u32 %s185, 1
        %s537 = scalar_lea.sflag [#allocation4], %s536
        %s538 = sand.u32 %s185, 1
        %s539 = smul.addr %s538, 24
        %s540 = scalar_lea.vmem [#allocation3], %s539
        %p541 = pneg %p198
        %p542 = pneg %p195
        %p543 = scmp.lt.s32.totalorder %s38, 3
        %s544 = scalar_select %p543, %s38, 3
        %s545 = smul.addr %s544, 4
        %s546 = smul.addr %s545, 4
        %s547 = scalar_lea.vmem %s6, %s546
        %p548 = pneg %p224
        %p549 = pneg %p221
        %p550 = scmp.lt.s32.totalorder %s38, 3
        %s551 = scalar_select %p550, %s38, 3
        %s552 = smul.addr %s551, 4
        %s553 = smul.addr %s552, 4
        %s554 = scalar_lea.vmem %s7, %s553
        %p555 = pneg %p250
        %p556 = pneg %p247
        %p557 = scmp.lt.s32.totalorder %s38, 3
        %s558 = scalar_select %p557, %s38, 3
        %s559 = smul.addr %s558, 4
        %s560 = smul.addr %s559, 4
        %s561 = scalar_lea.vmem %s8, %s560
        %p562 = pneg %p276
        %p563 = pneg %p273
        %p564 = scmp.lt.s32.totalorder %s38, 3
        %s565 = scalar_select %p564, %s38, 3
        %s566 = smul.addr %s565, 4
        %s567 = scalar_lea.vmem %s9, %s566
        %p568 = pneg %p302
        %p569 = pneg %p299
        %p570 = pneg %p323
        %p571 = pneg %p320
        %p572 = pneg %p349
        %p573 = pneg %p346
        %s574 = sand.u32 %s336, 1
        %s575 = scalar_lea.sflag [#allocation5], %s574
        %s576 = sand.u32 %s336, 1
        %s577 = smul.addr %s576, 8
        %s578 = scalar_lea.vmem [#allocation6], %s577
        %p579 = pneg %p375
        %p580 = pneg %p372
        %s581 = sand.u32 %s362, 1
        %s582 = scalar_lea.sflag [#allocation8], %s581
        %s583 = sand.u32 %s362, 1
        %s584 = smul.addr %s583, 24
        %s585 = scalar_lea.vmem [#allocation7], %s584
        %p586 = scmp.lt.s32.totalorder %s37, 1
        %s587 = scalar_select %p586, %s37, 1
        %s588 = smul.addr %s587, 4
        %s589 = scalar_lea.vmem %s0, %s588
        %p590 = scmp.lt.s32.totalorder %s37, 1
        %s591 = scalar_select %p590, %s37, 1
        %s592 = smul.addr %s591, 8
        %s593 = scalar_lea.vmem %s1, %s592
        %p594 = scmp.lt.s32.totalorder %s37, 1
        %s595 = scalar_select %p594, %s37, 1
        %s596 = smul.addr %s595, 4
        %s597 = scalar_lea.vmem %s2, %s596
        %p598 = scmp.lt.s32.totalorder %s37, 1
        %s599 = scalar_select %p598, %s37, 1
        %p600 = scmp.lt.s32.totalorder %s38, 3
        %s601 = scalar_select %p600, %s38, 3
        %s602 = smul.addr %s599, 4
        %s603 = sadd.s32 %s601, %s602
        %s604 = smul.addr %s603, 4
        %s605 = scalar_lea.vmem %s3, %s604
        %p606 = scmp.lt.s32.totalorder %s37, 1
        %s607 = scalar_select %p606, %s37, 1
        %s608 = scalar_lea.vmem %s4, %s607
        %p609 = scmp.lt.s32.totalorder %s38, 3
        %s610 = scalar_select %p609, %s38, 3
        %s611 = smul.addr %s610, 4
        %s612 = smul.addr %s611, 4
        %s613 = scalar_lea.vmem %s6, %s612
        %p614 = scmp.lt.s32.totalorder %s38, 3
        %s615 = scalar_select %p614, %s38, 3
        %s616 = smul.addr %s615, 4
        %s617 = smul.addr %s616, 4
        %s618 = scalar_lea.vmem %s7, %s617
        %p619 = scmp.lt.s32.totalorder %s38, 3
        %s620 = scalar_select %p619, %s38, 3
        %s621 = smul.addr %s620, 4
        %s622 = smul.addr %s621, 4
        %s623 = scalar_lea.vmem %s8, %s622
        %p624 = scmp.lt.s32.totalorder %s38, 3
        %s625 = scalar_select %p624, %s38, 3
        %s626 = smul.addr %s625, 4
        %s627 = scalar_lea.vmem %s9, %s626
        %v629 = vld [vmem:[%s589] sm:$0xf]
        %v630 = vld [vmem:[%s613] sm:$0xf]
        %v631 = vld [vmem:[%s613 + $0x4] sm:$0xf]
        %v632 = vld [vmem:[%s613 + $0x8] sm:$0xf]
        %v633 = vld [vmem:[%s613 + $0xc] sm:$0xf]
        %v638 = vunpack.c.l.b16 %v630
        %v639 = vunpack.c.l.b16 %v631
        %v640 = vunpack.c.l.b16 %v632
        %v641 = vunpack.c.l.b16 %v633
        %v642 = vpack.c.b16 %v639, %v638
        %v643 = vpack.c.b16 %v641, %v640
        %vm646 = vcmask 261120
        %v648 = vsel %vm646, %v629, 0
        %650 = vmatprep.subr.bf16.mxu0 0
        %651 = vmatpush1.bf16.msra.mxu0 0
        %652 = vmatprep.subr.bf16.mxu0 0
        %653 = vmatpush1.bf16.msra.mxu0 0
        %654 = vmatprep.subr.bf16.mxu0 0
        %655 = vmatpush1.bf16.msra.mxu0 0
        %656 = vmatprep.subr.bf16.mxu0 0
        %657 = vmatpush1.bf16.msra.mxu0 0
        %658 = vmatprep.subr.bf16.mxu0 0
        %659 = vmatpush1.bf16.msra.mxu0 0
        %660 = vmatprep.subr.bf16.mxu0 0
        %661 = vmatpush1.bf16.msra.mxu0 0
        %662 = vmatprep.subr.bf16.mxu0 0
        %663 = vmatpush1.bf16.msra.mxu0 %v643
        %664 = vmatprep.subr.bf16.mxu0 0
        %665 = vmatpush1.bf16.msra.mxu0 %v642
        %666 = vmatprep.subr.bf16.mxu0 0
        %667 = vmatpush2.bf16.msra.mxu0 0
        %668 = vmatprep.subr.bf16.mxu0 0
        %669 = vmatpush2.bf16.msra.mxu0 0
        %670 = vmatprep.subr.bf16.mxu0 0
        %671 = vmatpush2.bf16.msra.mxu0 0
        %672 = vmatprep.subr.bf16.mxu0 0
        %673 = vmatpush2.bf16.msra.mxu0 0
        %674 = vmatprep.subr.bf16.mxu0 0
        %675 = vmatpush2.bf16.msra.mxu0 0
        %676 = vmatprep.subr.bf16.mxu0 0
        %677 = vmatpush2.bf16.msra.mxu0 0
        %678 = vmatprep.subr.bf16.mxu0 0
        %679 = vmatpush2.bf16.msra.mxu0 0
        %680 = vmatprep.subr.bf16.mxu0 0
        %681 = vmatpush2.bf16.msra.mxu0 0
        %682 = vmatprep.mubr.bf16.mxu0 0
        %683 = vmatmul.mubr.bf16.gmra.mxu0 %v648
        %v684 = vpop.f32.mrf.mxu0
        %v685 = vadd.f32 0.0, %v684
        %v686 = vpop.f32.mrf.mxu0
        %v687 = vpop.f32.mrf.mxu0
        %v688 = vpop.f32.mrf.mxu0
        %689 = vdwg.mxu0
        %v690 = vld [vmem:[%s618] sm:$0xf]
        %v691 = vld [vmem:[%s618 + $0x4] sm:$0xf]
        %v692 = vld [vmem:[%s618 + $0x8] sm:$0xf]
        %v693 = vld [vmem:[%s618 + $0xc] sm:$0xf]
        %v698 = vunpack.c.l.b16 %v690
        %v699 = vunpack.c.l.b16 %v691
        %v700 = vunpack.c.l.b16 %v692
        %v701 = vunpack.c.l.b16 %v693
        %v702 = vpack.c.b16 %v699, %v698
        %v703 = vpack.c.b16 %v701, %v700
        %706 = vmatprep.subr.bf16.mxu0 0
        %707 = vmatpush1.bf16.msra.mxu0 0
        %708 = vmatprep.subr.bf16.mxu0 0
        %709 = vmatpush1.bf16.msra.mxu0 0
        %710 = vmatprep.subr.bf16.mxu0 0
        %711 = vmatpush1.bf16.msra.mxu0 0
        %712 = vmatprep.subr.bf16.mxu0 0
        %713 = vmatpush1.bf16.msra.mxu0 0
        %714 = vmatprep.subr.bf16.mxu0 0
        %715 = vmatpush1.bf16.msra.mxu0 0
        %716 = vmatprep.subr.bf16.mxu0 0
        %717 = vmatpush1.bf16.msra.mxu0 0
        %718 = vmatprep.subr.bf16.mxu0 0
        %719 = vmatpush1.bf16.msra.mxu0 %v703
        %720 = vmatprep.subr.bf16.mxu0 0
        %721 = vmatpush1.bf16.msra.mxu0 %v702
        %722 = vmatprep.subr.bf16.mxu0 0
        %723 = vmatpush2.bf16.msra.mxu0 0
        %724 = vmatprep.subr.bf16.mxu0 0
        %725 = vmatpush2.bf16.msra.mxu0 0
        %726 = vmatprep.subr.bf16.mxu0 0
        %727 = vmatpush2.bf16.msra.mxu0 0
        %728 = vmatprep.subr.bf16.mxu0 0
        %729 = vmatpush2.bf16.msra.mxu0 0
        %730 = vmatprep.subr.bf16.mxu0 0
        %731 = vmatpush2.bf16.msra.mxu0 0
        %732 = vmatprep.subr.bf16.mxu0 0
        %733 = vmatpush2.bf16.msra.mxu0 0
        %734 = vmatprep.subr.bf16.mxu0 0
        %735 = vmatpush2.bf16.msra.mxu0 0
        %736 = vmatprep.subr.bf16.mxu0 0
        %737 = vmatpush2.bf16.msra.mxu0 0
        %738 = vmatprep.mubr.bf16.mxu0 0
        %739 = vmatmul.mubr.bf16.gmra.mxu0 %v648
        %v740 = vpop.f32.mrf.mxu0
        %v741 = vadd.f32 0.0, %v740
        %v742 = vpop.f32.mrf.mxu0
        %v743 = vpop.f32.mrf.mxu0
        %v744 = vpop.f32.mrf.mxu0
        %745 = vdwg.mxu0
        %v746 = vld [vmem:[%s623] sm:$0xf]
        %v747 = vld [vmem:[%s623 + $0x4] sm:$0xf]
        %v748 = vld [vmem:[%s623 + $0x8] sm:$0xf]
        %v749 = vld [vmem:[%s623 + $0xc] sm:$0xf]
        %v754 = vunpack.c.l.b16 %v746
        %v755 = vunpack.c.l.b16 %v747
        %v756 = vunpack.c.l.b16 %v748
        %v757 = vunpack.c.l.b16 %v749
        %v758 = vpack.c.b16 %v755, %v754
        %v759 = vpack.c.b16 %v757, %v756
        %762 = vmatprep.subr.bf16.mxu0 0
        %763 = vmatpush1.bf16.msra.mxu0 0
        %764 = vmatprep.subr.bf16.mxu0 0
        %765 = vmatpush1.bf16.msra.mxu0 0
        %766 = vmatprep.subr.bf16.mxu0 0
        %767 = vmatpush1.bf16.msra.mxu0 0
        %768 = vmatprep.subr.bf16.mxu0 0
        %769 = vmatpush1.bf16.msra.mxu0 0
        %770 = vmatprep.subr.bf16.mxu0 0
        %771 = vmatpush1.bf16.msra.mxu0 0
        %772 = vmatprep.subr.bf16.mxu0 0
        %773 = vmatpush1.bf16.msra.mxu0 0
        %774 = vmatprep.subr.bf16.mxu0 0
        %775 = vmatpush1.bf16.msra.mxu0 %v759
        %776 = vmatprep.subr.bf16.mxu0 0
        %777 = vmatpush1.bf16.msra.mxu0 %v758
        %778 = vmatprep.subr.bf16.mxu0 0
        %779 = vmatpush2.bf16.msra.mxu0 0
        %780 = vmatprep.subr.bf16.mxu0 0
        %781 = vmatpush2.bf16.msra.mxu0 0
        %782 = vmatprep.subr.bf16.mxu0 0
        %783 = vmatpush2.bf16.msra.mxu0 0
        %784 = vmatprep.subr.bf16.mxu0 0
        %785 = vmatpush2.bf16.msra.mxu0 0
        %786 = vmatprep.subr.bf16.mxu0 0
        %787 = vmatpush2.bf16.msra.mxu0 0
        %788 = vmatprep.subr.bf16.mxu0 0
        %789 = vmatpush2.bf16.msra.mxu0 0
        %790 = vmatprep.subr.bf16.mxu0 0
        %791 = vmatpush2.bf16.msra.mxu0 0
        %792 = vmatprep.subr.bf16.mxu0 0
        %793 = vmatpush2.bf16.msra.mxu0 0
        %794 = vmatprep.mubr.bf16.mxu0 0
        %795 = vmatmul.mubr.bf16.gmra.mxu0 %v648
        %v796 = vpop.f32.mrf.mxu0
        %v797 = vadd.f32 0.0, %v796
        %v798 = vpop.f32.mrf.mxu0
        %v799 = vpop.f32.mrf.mxu0
        %v800 = vpop.f32.mrf.mxu0
        %801 = vdwg.mxu0
        %v802 = vpack.c.bf16 %v685, %v685
        %v803 = vpack.c.bf16 %v741, %v741
        %vm804 = vcmask 64512
        %v806 = vsel %vm804, %v802, 0
        %v809 = vsel %vm804, %v803, 0
        %811 = vmatprep.subr.bf16.mxu0 0
        %812 = vmatpush1.bf16.xpose.msra.mxu0 0
        %813 = vmatprep.subr.bf16.mxu0 0
        %814 = vmatpush1.bf16.xpose.msra.mxu0 0
        %815 = vmatprep.subr.bf16.mxu0 0
        %816 = vmatpush1.bf16.xpose.msra.mxu0 0
        %817 = vmatprep.subr.bf16.mxu0 0
        %818 = vmatpush1.bf16.xpose.msra.mxu0 0
        %819 = vmatprep.subr.bf16.mxu0 0
        %820 = vmatpush1.bf16.xpose.msra.mxu0 0
        %821 = vmatprep.subr.bf16.mxu0 0
        %822 = vmatpush1.bf16.xpose.msra.mxu0 0
        %823 = vmatprep.subr.bf16.mxu0 0
        %824 = vmatpush1.bf16.xpose.msra.mxu0 0
        %825 = vmatprep.subr.bf16.mxu0 0
        %826 = vmatpush1.bf16.xpose.msra.mxu0 %v809
        %827 = vmatprep.subr.bf16.mxu0 0
        %828 = vmatpush2.bf16.xpose.msra.mxu0 0
        %829 = vmatprep.subr.bf16.mxu0 0
        %830 = vmatpush2.bf16.xpose.msra.mxu0 0
        %831 = vmatprep.subr.bf16.mxu0 0
        %832 = vmatpush2.bf16.xpose.msra.mxu0 0
        %833 = vmatprep.subr.bf16.mxu0 0
        %834 = vmatpush2.bf16.xpose.msra.mxu0 0
        %835 = vmatprep.subr.bf16.mxu0 0
        %836 = vmatpush2.bf16.xpose.msra.mxu0 0
        %837 = vmatprep.subr.bf16.mxu0 0
        %838 = vmatpush2.bf16.xpose.msra.mxu0 0
        %839 = vmatprep.subr.bf16.mxu0 0
        %840 = vmatpush2.bf16.xpose.msra.mxu0 0
        %841 = vmatprep.subr.bf16.mxu0 0
        %842 = vmatpush2.bf16.xpose.msra.mxu0 0
        %843 = vmatprep.mubr.bf16.mxu0 0
        %844 = vmatmul.mubr.bf16.gmra.mxu0 %v806
        %v845 = vpop.f32.mrf.mxu0
        %v846 = vadd.f32 0.0, %v845
        %v847 = vpop.f32.mrf.mxu0
        %v848 = vpop.f32.mrf.mxu0
        %v849 = vpop.f32.mrf.mxu0
        %850 = vdwg.mxu0
        %v851 = vmul.f32 %v846, 0.35355338
        %v852 = vld [vmem:[%s605] sm:$0xf]
        %v853 = vunpack.c.l.bf16 %v852
        %v854 = vadd.f32 %v851, %v853
        %v855 = vld [vmem:[%s608] sm:$0x1]
        %v857 = vlaneseq
        %v858 = vshrl.u32 %v857, 7
        %v859 = vsub.s32 0, %v858
        %v860 = vrot.slane %v855, %v859
        %v862 = vadd.f32 %v854, %v860
        %v863 = vsel %vm804, %v862, -inf
        %864 = vmax.xlane.f32.xlu0 %v863
        %v865 = vpop.xlane.xlu0 %864
        %v866 = vsub.f32 %v862, %v865
        %v867 = vmul.f32 %v866, 1.442695
        %v868 = vpow.pop %v867
        %v869 = vsel %vm804, %v868, 0.0
        %870 = vadd.xlane.f32.xlu0 %v869
        %v871 = vpop.xlane.xlu0 %870
        %v872 = vrcp.pop %v871
        %v873 = vmul.f32 %v868, %v872
        %p874 = scmp.eq.s32.totalorder %s38, 0
        // Predicated region
        $region69: #{tpu_custom_call.1} parent=63 // pred_check
          %p875 = pneg %p874
        $region70: #{tpu_custom_call.1} parent=63 // pred_check_branch
          %877 = sbr.rel (%p875) target = $region72
        $region71: #{tpu_custom_call.1} parent=63 // pred_region
          %878 = vst.msk [vmem:[%s578] sm:$0xff] %vm646, 0.0
          %879 = vst.msk [vmem:[#allocation2] sm:$0xff] %vm804, 0.0
        $region72: #{tpu_custom_call.1} parent=63 // pred_fallthru
          _
        %v880 = vld [vmem:[#allocation2] sm:$0xff]
        %v881 = vadd.f32 %v880, %v873
        %882 = vst.msk [vmem:[#allocation2] sm:$0xff] %vm804, %v881
        %v883 = vpack.c.bf16 %v873, %v873
        %v884 = vpack.c.bf16 %v797, %v797
        %v886 = vsel %vm804, %v883, 0
        %vm888 = vcmask 1043456
        %v890 = vsel %vm888, %v884, 0
        %892 = vmatprep.subr.bf16.mxu0 0
        %893 = vmatpush1.bf16.msra.mxu0 0
        %894 = vmatprep.subr.bf16.mxu0 0
        %895 = vmatpush1.bf16.msra.mxu0 0
        %896 = vmatprep.subr.bf16.mxu0 0
        %897 = vmatpush1.bf16.msra.mxu0 0
        %898 = vmatprep.subr.bf16.mxu0 0
        %899 = vmatpush1.bf16.msra.mxu0 0
        %900 = vmatprep.subr.bf16.mxu0 0
        %901 = vmatpush1.bf16.msra.mxu0 0
        %902 = vmatprep.subr.bf16.mxu0 0
        %903 = vmatpush1.bf16.msra.mxu0 0
        %904 = vmatprep.subr.bf16.mxu0 0
        %905 = vmatpush1.bf16.msra.mxu0 0
        %906 = vmatprep.subr.bf16.mxu0 0
        %907 = vmatpush1.bf16.msra.mxu0 %v890
        %908 = vmatprep.subr.bf16.mxu0 0
        %909 = vmatpush2.bf16.msra.mxu0 0
        %910 = vmatprep.subr.bf16.mxu0 0
        %911 = vmatpush2.bf16.msra.mxu0 0
        %912 = vmatprep.subr.bf16.mxu0 0
        %913 = vmatpush2.bf16.msra.mxu0 0
        %914 = vmatprep.subr.bf16.mxu0 0
        %915 = vmatpush2.bf16.msra.mxu0 0
        %916 = vmatprep.subr.bf16.mxu0 0
        %917 = vmatpush2.bf16.msra.mxu0 0
        %918 = vmatprep.subr.bf16.mxu0 0
        %919 = vmatpush2.bf16.msra.mxu0 0
        %920 = vmatprep.subr.bf16.mxu0 0
        %921 = vmatpush2.bf16.msra.mxu0 0
        %922 = vmatprep.subr.bf16.mxu0 0
        %923 = vmatpush2.bf16.msra.mxu0 0
        %924 = vmatprep.mubr.bf16.mxu0 0
        %925 = vmatmul.mubr.bf16.gmra.mxu0 %v886
        %v926 = vpop.f32.mrf.mxu0
        %v927 = vadd.f32 0.0, %v926
        %v928 = vpop.f32.mrf.mxu0
        %v929 = vpop.f32.mrf.mxu0
        %v930 = vpop.f32.mrf.mxu0
        %931 = vdwg.mxu0
        %v932 = vld [vmem:[%s578] sm:$0xff]
        %v933 = vpack.c.bf16 %v927, %v927
        %v934 = vld [vmem:[%s627] sm:$0xf]
        %v936 = vsel %vm804, %v933, 0
        %v939 = vsel %vm888, %v934, 0
        %941 = vmatprep.subr.bf16.mxu0 0
        %942 = vmatpush1.bf16.msra.mxu0 0
        %943 = vmatprep.subr.bf16.mxu0 0
        %944 = vmatpush1.bf16.msra.mxu0 0
        %945 = vmatprep.subr.bf16.mxu0 0
        %946 = vmatpush1.bf16.msra.mxu0 0
        %947 = vmatprep.subr.bf16.mxu0 0
        %948 = vmatpush1.bf16.msra.mxu0 0
        %949 = vmatprep.subr.bf16.mxu0 0
        %950 = vmatpush1.bf16.msra.mxu0 0
        %951 = vmatprep.subr.bf16.mxu0 0
        %952 = vmatpush1.bf16.msra.mxu0 0
        %953 = vmatprep.subr.bf16.mxu0 0
        %954 = vmatpush1.bf16.msra.mxu0 0
        %955 = vmatprep.subr.bf16.mxu0 0
        %956 = vmatpush1.bf16.msra.mxu0 %v939
        %957 = vmatprep.subr.bf16.mxu0 0
        %958 = vmatpush2.bf16.msra.mxu0 0
        %959 = vmatprep.subr.bf16.mxu0 0
        %960 = vmatpush2.bf16.msra.mxu0 0
        %961 = vmatprep.subr.bf16.mxu0 0
        %962 = vmatpush2.bf16.msra.mxu0 0
        %963 = vmatprep.subr.bf16.mxu0 0
        %964 = vmatpush2.bf16.msra.mxu0 0
        %965 = vmatprep.subr.bf16.mxu0 0
        %966 = vmatpush2.bf16.msra.mxu0 0
        %967 = vmatprep.subr.bf16.mxu0 0
        %968 = vmatpush2.bf16.msra.mxu0 0
        %969 = vmatprep.subr.bf16.mxu0 0
        %970 = vmatpush2.bf16.msra.mxu0 0
        %971 = vmatprep.subr.bf16.mxu0 0
        %972 = vmatpush2.bf16.msra.mxu0 0
        %973 = vmatprep.mubr.bf16.mxu0 0
        %974 = vmatmul.mubr.bf16.gmra.mxu0 %v936
        %v975 = vpop.f32.mrf.mxu0
        %v976 = vadd.f32 0.0, %v975
        %v977 = vpop.f32.mrf.mxu0
        %v978 = vpop.f32.mrf.mxu0
        %v979 = vpop.f32.mrf.mxu0
        %980 = vdwg.mxu0
        %v981 = vadd.f32 %v932, %v976
        %982 = vst.msk [vmem:[%s578] sm:$0xff] %vm646, %v981
        %p983 = scmp.eq.s32.totalorder %s38, 3
        // Predicated region
        $region73: #{tpu_custom_call.1} parent=63 // pred_check
          %p984 = pneg %p983
        $region74: #{tpu_custom_call.1} parent=63 // pred_check_branch
          %986 = sbr.rel (%p984) target = $region76
        $region75: #{tpu_custom_call.1} parent=63 // pred_region
          %v987 = vld [vmem:[#allocation2] sm:$0xff]
          %v988 = vmul.f32 %v987, 0.25
          %v989 = vld [vmem:[%s10] sm:$0xf]
          %v990 = vld [vmem:[%s10 + $0x4] sm:$0xf]
          %v991 = vld [vmem:[%s10 + $0x8] sm:$0xf]
          %v992 = vld [vmem:[%s10 + $0xc] sm:$0xf]
          %v997 = vunpack.c.l.b16 %v989
          %v998 = vunpack.c.l.b16 %v990
          %v999 = vunpack.c.l.b16 %v991
          %v1000 = vunpack.c.l.b16 %v992
          %v1001 = vpack.c.b16 %v998, %v997
          %v1002 = vpack.c.b16 %v1000, %v999
          %1005 = vmatprep.subr.bf16.mxu0 0
          %1006 = vmatpush1.bf16.msra.mxu0 0
          %1007 = vmatprep.subr.bf16.mxu0 0
          %1008 = vmatpush1.bf16.msra.mxu0 0
          %1009 = vmatprep.subr.bf16.mxu0 0
          %1010 = vmatpush1.bf16.msra.mxu0 0
          %1011 = vmatprep.subr.bf16.mxu0 0
          %1012 = vmatpush1.bf16.msra.mxu0 0
          %1013 = vmatprep.subr.bf16.mxu0 0
          %1014 = vmatpush1.bf16.msra.mxu0 0
          %1015 = vmatprep.subr.bf16.mxu0 0
          %1016 = vmatpush1.bf16.msra.mxu0 0
          %1017 = vmatprep.subr.bf16.mxu0 0
          %1018 = vmatpush1.bf16.msra.mxu0 %v1002
          %1019 = vmatprep.subr.bf16.mxu0 0
          %1020 = vmatpush1.bf16.msra.mxu0 %v1001
          %1021 = vmatprep.subr.bf16.mxu0 0
          %1022 = vmatpush2.bf16.msra.mxu0 0
          %1023 = vmatprep.subr.bf16.mxu0 0
          %1024 = vmatpush2.bf16.msra.mxu0 0
          %1025 = vmatprep.subr.bf16.mxu0 0
          %1026 = vmatpush2.bf16.msra.mxu0 0
          %1027 = vmatprep.subr.bf16.mxu0 0
          %1028 = vmatpush2.bf16.msra.mxu0 0
          %1029 = vmatprep.subr.bf16.mxu0 0
          %1030 = vmatpush2.bf16.msra.mxu0 0
          %1031 = vmatprep.subr.bf16.mxu0 0
          %1032 = vmatpush2.bf16.msra.mxu0 0
          %1033 = vmatprep.subr.bf16.mxu0 0
          %1034 = vmatpush2.bf16.msra.mxu0 0
          %1035 = vmatprep.subr.bf16.mxu0 0
          %1036 = vmatpush2.bf16.msra.mxu0 0
          %1037 = vmatprep.mubr.bf16.mxu0 0
          %1038 = vmatmul.mubr.bf16.gmra.mxu0 %v648
          %v1039 = vpop.f32.mrf.mxu0
          %v1040 = vadd.f32 0.0, %v1039
          %v1041 = vpop.f32.mrf.mxu0
          %v1042 = vpop.f32.mrf.mxu0
          %v1043 = vpop.f32.mrf.mxu0
          %1044 = vdwg.mxu0
          %v1045 = vpack.c.bf16 %v1040, %v1040
          %v1046 = vld [vmem:[%s593] sm:$0xff]
          %v1047 = vld [vmem:[%s597] sm:$0x7]
          %1049 = vset.pattern.permute.xlu0 0
          %1050 = vperm.xlu0 %1049, %v1046
          %v1051 = vpop.permute.xlu0 %1050
          %v1053 = vlaneseq
          %v1054 = vshrl.u32 %v1053, 7
          %v1055 = vsub.s32 0, %v1054
          %v1056 = vrot.slane %v1047, %v1055
          %v1057 = vsub.f32 %v1051, %v1056
          %1058 = vset.pattern.permute.xlu0 1
          %1059 = vperm.xlu0 %1058, %v1046
          %v1060 = vpop.permute.xlu0 %1059
          %v1062 = vlaneseq
          %v1063 = vshrl.u32 %v1062, 7
          %v1064 = vsub.s32 1, %v1063
          %v1065 = vrot.slane %v1047, %v1064
          %v1066 = vsub.f32 %v1060, %v1065
          %1067 = vset.pattern.permute.xlu0 2
          %1068 = vperm.xlu0 %1067, %v1046
          %v1069 = vpop.permute.xlu0 %1068
          %v1071 = vlaneseq
          %v1072 = vshrl.u32 %v1071, 7
          %v1073 = vsub.s32 2, %v1072
          %v1074 = vrot.slane %v1047, %v1073
          %v1075 = vsub.f32 %v1069, %v1074
          %v1076 = vmul.f32 %v1057, %v1057
          %v1077 = vmul.f32 %v1066, %v1066
          %v1078 = vadd.f32 %v1076, %v1077
          %v1079 = vmul.f32 %v1075, %v1075
          %v1080 = vadd.f32 %v1078, %v1079
          %v1081 = vadd.f32 %v1080, 1e-06
          %v1082 = vrsqrt.pop %v1081
          %v1083 = vmul.f32 %v988, %v1082
          %v1084 = vmul.f32 %v1083, %v1057
          %v1085 = vpack.c.bf16 %v1084, %v1084
          %v1087 = vsel %vm804, %v1085, 0
          %v1090 = vsel %vm888, %v1045, 0
          %1092 = vmatprep.subr.bf16.mxu0 0
          %1093 = vmatpush1.bf16.msra.mxu0 0
          %1094 = vmatprep.subr.bf16.mxu0 0
          %1095 = vmatpush1.bf16.msra.mxu0 0
          %1096 = vmatprep.subr.bf16.mxu0 0
          %1097 = vmatpush1.bf16.msra.mxu0 0
          %1098 = vmatprep.subr.bf16.mxu0 0
          %1099 = vmatpush1.bf16.msra.mxu0 0
          %1100 = vmatprep.subr.bf16.mxu0 0
          %1101 = vmatpush1.bf16.msra.mxu0 0
          %1102 = vmatprep.subr.bf16.mxu0 0
          %1103 = vmatpush1.bf16.msra.mxu0 0
          %1104 = vmatprep.subr.bf16.mxu0 0
          %1105 = vmatpush1.bf16.msra.mxu0 0
          %1106 = vmatprep.subr.bf16.mxu0 0
          %1107 = vmatpush1.bf16.msra.mxu0 %v1090
          %1108 = vmatprep.subr.bf16.mxu0 0
          %1109 = vmatpush2.bf16.msra.mxu0 0
          %1110 = vmatprep.subr.bf16.mxu0 0
          %1111 = vmatpush2.bf16.msra.mxu0 0
          %1112 = vmatprep.subr.bf16.mxu0 0
          %1113 = vmatpush2.bf16.msra.mxu0 0
          %1114 = vmatprep.subr.bf16.mxu0 0
          %1115 = vmatpush2.bf16.msra.mxu0 0
          %1116 = vmatprep.subr.bf16.mxu0 0
          %1117 = vmatpush2.bf16.msra.mxu0 0
          %1118 = vmatprep.subr.bf16.mxu0 0
          %1119 = vmatpush2.bf16.msra.mxu0 0
          %1120 = vmatprep.subr.bf16.mxu0 0
          %1121 = vmatpush2.bf16.msra.mxu0 0
          %1122 = vmatprep.subr.bf16.mxu0 0
          %1123 = vmatpush2.bf16.msra.mxu0 0
          %1124 = vmatprep.mubr.bf16.mxu0 0
          %1125 = vmatmul.mubr.bf16.gmra.mxu0 %v1087
          %v1126 = vpop.f32.mrf.mxu0
          %v1127 = vadd.f32 0.0, %v1126
          %v1128 = vpop.f32.mrf.mxu0
          %v1129 = vpop.f32.mrf.mxu0
          %v1130 = vpop.f32.mrf.mxu0
          %1131 = vdwg.mxu0
          %v1132 = vld [vmem:[%s498] sm:$0xff]
          %v1133 = vadd.f32 %v1132, %v1127
          %1134 = vst.msk [vmem:[%s585] sm:$0xff] %vm646, %v1133
          %v1135 = vmul.f32 %v1083, %v1066
          %v1136 = vpack.c.bf16 %v1135, %v1135
          %v1138 = vsel %vm804, %v1136, 0
          %1140 = vmatprep.subr.bf16.mxu0 0
          %1141 = vmatpush1.bf16.msra.mxu0 0
          %1142 = vmatprep.subr.bf16.mxu0 0
          %1143 = vmatpush1.bf16.msra.mxu0 0
          %1144 = vmatprep.subr.bf16.mxu0 0
          %1145 = vmatpush1.bf16.msra.mxu0 0
          %1146 = vmatprep.subr.bf16.mxu0 0
          %1147 = vmatpush1.bf16.msra.mxu0 0
          %1148 = vmatprep.subr.bf16.mxu0 0
          %1149 = vmatpush1.bf16.msra.mxu0 0
          %1150 = vmatprep.subr.bf16.mxu0 0
          %1151 = vmatpush1.bf16.msra.mxu0 0
          %1152 = vmatprep.subr.bf16.mxu0 0
          %1153 = vmatpush1.bf16.msra.mxu0 0
          %1154 = vmatprep.subr.bf16.mxu0 0
          %1155 = vmatpush1.bf16.msra.mxu0 %v1090
          %1156 = vmatprep.subr.bf16.mxu0 0
          %1157 = vmatpush2.bf16.msra.mxu0 0
          %1158 = vmatprep.subr.bf16.mxu0 0
          %1159 = vmatpush2.bf16.msra.mxu0 0
          %1160 = vmatprep.subr.bf16.mxu0 0
          %1161 = vmatpush2.bf16.msra.mxu0 0
          %1162 = vmatprep.subr.bf16.mxu0 0
          %1163 = vmatpush2.bf16.msra.mxu0 0
          %1164 = vmatprep.subr.bf16.mxu0 0
          %1165 = vmatpush2.bf16.msra.mxu0 0
          %1166 = vmatprep.subr.bf16.mxu0 0
          %1167 = vmatpush2.bf16.msra.mxu0 0
          %1168 = vmatprep.subr.bf16.mxu0 0
          %1169 = vmatpush2.bf16.msra.mxu0 0
          %1170 = vmatprep.subr.bf16.mxu0 0
          %1171 = vmatpush2.bf16.msra.mxu0 0
          %1172 = vmatprep.mubr.bf16.mxu0 0
          %1173 = vmatmul.mubr.bf16.gmra.mxu0 %v1138
          %v1174 = vpop.f32.mrf.mxu0
          %v1175 = vadd.f32 0.0, %v1174
          %v1176 = vpop.f32.mrf.mxu0
          %v1177 = vpop.f32.mrf.mxu0
          %v1178 = vpop.f32.mrf.mxu0
          %1179 = vdwg.mxu0
          %s1180 = scalar_lea.vmem %s498, 8 [#allocation3]
          %v1181 = vld [vmem:[%s1180] sm:$0xff]
          %v1182 = vadd.f32 %v1181, %v1175
          %s1183 = scalar_lea.vmem %s585, 8 [#allocation7]
          %1184 = vst.msk [vmem:[%s1183] sm:$0xff] %vm646, %v1182
          %v1185 = vmul.f32 %v1083, %v1075
          %v1186 = vpack.c.bf16 %v1185, %v1185
          %v1188 = vsel %vm804, %v1186, 0
          %1190 = vmatprep.subr.bf16.mxu0 0
          %1191 = vmatpush1.bf16.msra.mxu0 0
          %1192 = vmatprep.subr.bf16.mxu0 0
          %1193 = vmatpush1.bf16.msra.mxu0 0
          %1194 = vmatprep.subr.bf16.mxu0 0
          %1195 = vmatpush1.bf16.msra.mxu0 0
          %1196 = vmatprep.subr.bf16.mxu0 0
          %1197 = vmatpush1.bf16.msra.mxu0 0
          %1198 = vmatprep.subr.bf16.mxu0 0
          %1199 = vmatpush1.bf16.msra.mxu0 0
          %1200 = vmatprep.subr.bf16.mxu0 0
          %1201 = vmatpush1.bf16.msra.mxu0 0
          %1202 = vmatprep.subr.bf16.mxu0 0
          %1203 = vmatpush1.bf16.msra.mxu0 0
          %1204 = vmatprep.subr.bf16.mxu0 0
          %1205 = vmatpush1.bf16.msra.mxu0 %v1090
          %1206 = vmatprep.subr.bf16.mxu0 0
          %1207 = vmatpush2.bf16.msra.mxu0 0
          %1208 = vmatprep.subr.bf16.mxu0 0
          %1209 = vmatpush2.bf16.msra.mxu0 0
          %1210 = vmatprep.subr.bf16.mxu0 0
          %1211 = vmatpush2.bf16.msra.mxu0 0
          %1212 = vmatprep.subr.bf16.mxu0 0
          %1213 = vmatpush2.bf16.msra.mxu0 0
          %1214 = vmatprep.subr.bf16.mxu0 0
          %1215 = vmatpush2.bf16.msra.mxu0 0
          %1216 = vmatprep.subr.bf16.mxu0 0
          %1217 = vmatpush2.bf16.msra.mxu0 0
          %1218 = vmatprep.subr.bf16.mxu0 0
          %1219 = vmatpush2.bf16.msra.mxu0 0
          %1220 = vmatprep.subr.bf16.mxu0 0
          %1221 = vmatpush2.bf16.msra.mxu0 0
          %1222 = vmatprep.mubr.bf16.mxu0 0
          %1223 = vmatmul.mubr.bf16.gmra.mxu0 %v1188
          %v1224 = vpop.f32.mrf.mxu0
          %v1225 = vadd.f32 0.0, %v1224
          %v1226 = vpop.f32.mrf.mxu0
          %v1227 = vpop.f32.mrf.mxu0
          %v1228 = vpop.f32.mrf.mxu0
          %1229 = vdwg.mxu0
          %s1230 = scalar_lea.vmem %s498, 16 [#allocation3]
          %v1231 = vld [vmem:[%s1230] sm:$0xff]
          %v1232 = vadd.f32 %v1231, %v1225
          %s1233 = scalar_lea.vmem %s585, 16 [#allocation7]
          %1234 = vst.msk [vmem:[%s1233] sm:$0xff] %vm646, %v1232
        $region76: #{tpu_custom_call.1} parent=63 // pred_fallthru
          _
        %s1235 = sand.u32 %s336, 1
        %s1236 = scalar_lea.sflag [#allocation5], %s1235
        %s1237 = sand.u32 %s336, 1
        %s1238 = smul.addr %s1237, 8
        %s1239 = scalar_lea.vmem [#allocation6], %s1238
        %s1240 = sand.u32 %s362, 1
        %s1241 = scalar_lea.sflag [#allocation8], %s1240
        %s1242 = sand.u32 %s362, 1
        %s1243 = smul.addr %s1242, 24
        %s1244 = scalar_lea.vmem [#allocation7], %s1243
        // Predicated region
        $region77: #{tpu_custom_call.1} parent=63 // pred_check
          %p1245 = pneg %p346
        $region78: #{tpu_custom_call.1} parent=63 // pred_check_branch
          %1247 = sbr.rel (%p1245) target = $region80
        $region79: #{tpu_custom_call.1} parent=63 // pred_region
          %s1249 = ssub.s32 128, 128
          %1250 = vsyncadd %s1236, %s1249
          %s1251 = smul.addr %s37, 128
          %s1252 = scalar_lea.hbm %s11, %s1251
          %s1254 = sshll.u32 %s1239, 4
          %s1255 = int_to_ptr.vmem [resolvable:$true] %s1254
          %1257 = dma.vmem_to_hbm [thread:$0]  %s1255, 128, %s1252, %s1236
        $region80: #{tpu_custom_call.1} parent=63 // pred_fallthru
          _
        // Predicated region
        $region81: #{tpu_custom_call.1} parent=63 // pred_check
          %p1258 = pneg %p372
        $region82: #{tpu_custom_call.1} parent=63 // pred_check_branch
          %1260 = sbr.rel (%p1258) target = $region84
        $region83: #{tpu_custom_call.1} parent=63 // pred_region
          %s1262 = ssub.s32 384, 384
          %1263 = vsyncadd %s1241, %s1262
          %s1264 = smul.addr %s37, 3
          %s1265 = smul.addr %s1264, 128
          %s1266 = scalar_lea.hbm %s12, %s1265
          %s1267 = sshll.u32 %s1244, 4
          %s1268 = int_to_ptr.vmem [resolvable:$true] %s1267
          %1273 = dma.vmem_to_hbm [thread:$0]  %s1268, 384, %s1266, %s1241, 128, 128, 8
        $region84: #{tpu_custom_call.1} parent=63 // pred_fallthru
          _
      $region64: #{tpu_custom_call.1} parent=5 // pred_fallthru
        _
      %p1274 = scmp.le.s32.totalorder 2, %s28
      // Predicated region
      $region85: #{tpu_custom_call.1} parent=5 // pred_check
        %p1275 = pneg %p1274
      $region86: #{tpu_custom_call.1} parent=5 // pred_check_branch
        %1277 = sbr.rel (%p1275) target = $region88
      $region87: #{tpu_custom_call.1} parent=5 // pred_region
        %s1278 = ssub.s32 %s28, 2
        // Predicated region
        $region89: #{tpu_custom_call.1} parent=87 // pred_check
          %p1279 = pneg %p352
        $region90: #{tpu_custom_call.1} parent=87 // pred_check_branch
          %1281 = sbr.rel (%p1279) target = $region92
        $region91: #{tpu_custom_call.1} parent=87 // pred_region
          %s1282 = sand.u32 %s337, 1
          %s1283 = scalar_lea.sflag [#allocation5], %s1282
          %s1284 = sand.u32 %s337, 1
          %s1285 = smul.addr %s1284, 8
          %s1286 = scalar_lea.vmem [#allocation6], %s1285
          %1287 = dma.done %s1283, 128
        $region92: #{tpu_custom_call.1} parent=87 // pred_fallthru
          _
        // Predicated region
        $region93: #{tpu_custom_call.1} parent=87 // pred_check
          %p1288 = pneg %p378
        $region94: #{tpu_custom_call.1} parent=87 // pred_check_branch
          %1290 = sbr.rel (%p1288) target = $region96
        $region95: #{tpu_custom_call.1} parent=87 // pred_region
          %s1291 = sand.u32 %s363, 1
          %s1292 = scalar_lea.sflag [#allocation8], %s1291
          %s1293 = sand.u32 %s363, 1
          %s1294 = smul.addr %s1293, 24
          %s1295 = scalar_lea.vmem [#allocation7], %s1294
          %1296 = dma.done %s1292, 384
        $region96: #{tpu_custom_call.1} parent=87 // pred_fallthru
          _
      $region88: #{tpu_custom_call.1} parent=5 // pred_fallthru
        _
    $region6: #{tpu_custom_call.1} parent=1 // loop_footer
      %s32 = sadd.s32 1, %s28
    $region7: #{tpu_custom_call.1} parent=1 // loop_footer_branch
      %27 = sbr.rel target = $region3
    $region8: #{tpu_custom_call.1} parent=1 // loop_exit
      _
    %1297 = vsyncpa [#allocation4], 1
    %s1298 = scalar_lea.sflag [#allocation4], 1
    %1299 = vsyncpa %s1298, 1
    %1300 = vsyncpa [#allocation5], 1
    %s1301 = scalar_lea.sflag [#allocation5], 1
    %1302 = vsyncpa %s1301, 1
    %1303 = vsyncpa [#allocation8], 1
    %s1304 = scalar_lea.sflag [#allocation8], 1
    %1305 = vsyncpa %s1304, 1

</llo_original>
